<compile_context>
chip_gen: v7x
topology: tpu7x:2x2x1
jax: 0.10.0
libtpu: 0.0.40
codegen_flags: <defaults>
</compile_context>

<pallas_src>
import functools

import jax
import jax.numpy as jnp
from jax import lax
from jax.experimental import pallas as pl
from jax.experimental.pallas import tpu as pltpu

# Module constants in the source are MEME_SIZE = VOC_SIZE = 0 (degenerate);
# we pick small non-zero synthetic sizes consistent with the forward pass.
HIDDEN_SIZE = 128
VOC_SIZE = 16
MEME_SIZE = 8

VOC_PAD = 128    # lane-dense vocab slab for in-kernel compute (not for HBM outputs)
MEME_PAD = 128   # lane-dense meme slab
MAX_T_TILE = 32  # time-chunk cap (bounds VMEM; v7x-safe)


def _round_up(x, m):
    return -(-x // m) * m


def _make_kernel(has_meme: bool, voc: int):
    """Fused label_RNN kernel for one (batch tile, time chunk) grid step."""

    def kernel(x_ref, init_ref, w_m2h_ref, b_m2h_ref, w_h_ref, w_i_ref,
               b_i2h_ref, w_h2o_ref, b_h2o_ref,
               out_ref, hid_ref, nxt_ref, h_scratch, hbuf_ref):
        t_tile, tile_b, voc_pad = x_ref.shape
        hsz = h_scratch.shape[-1]
        tc = pl.program_id(1)

        # ---- (re)initialize the carried hidden state at the first time chunk.
        # The tiny init matmul is computed unconditionally (keeps MXU ops out of
        # the scf.if region); only the assignment is gated.
        if has_meme:
            h0 = (jnp.dot(init_ref[...], w_m2h_ref[...],
                          preferred_element_type=jnp.float32) + b_m2h_ref[...])
        else:
            h0 = init_ref[...]

        @pl.when(tc == 0)
        def _():
            h_scratch[...] = h0

        # ---- hoisted input projection for the whole chunk: one MXU matmul.
        x_flat = x_ref[...].reshape(t_tile * tile_b, voc_pad)
        xproj = (jnp.dot(x_flat, w_i_ref[...],
                         preferred_element_type=jnp.float32)
                 + b_i2h_ref[...])
        hbuf_ref[...] = xproj.reshape(t_tile, tile_b, hsz)

        # ---- serial recurrence: only h @ W_h (128x128) per step; hidden lives
        # in the loop carry (vregs); hbuf is overwritten in place with h_t.
        w_h = w_h_ref[...]

        def step(t, h):
            h_new = (jnp.dot(h.astype(jnp.bfloat16), w_h,
                             preferred_element_type=jnp.float32)
                     + hbuf_ref[t])
            hbuf_ref[t] = h_new
            return h_new

        h_final = lax.fori_loop(0, t_tile, step, h_scratch[...],
                                unroll=True if t_tile <= 8 else 2)
        h_scratch[...] = h_final
        # NOTE: for padded batch rows under has_meme this holds b_m2h-driven
        # values, not zeros; the wrapper slices those rows away.
        hid_ref[...] = h_final

        # ---- batched output projection + log-softmax over the whole chunk.
        h_all = hbuf_ref[...].reshape(t_tile * tile_b, hsz).astype(jnp.bfloat16)
        logits = (jnp.dot(h_all, w_h2o_ref[...],
                          preferred_element_type=jnp.float32) + b_h2o_ref[...])
        # dropout(p=0.1) is the identity in eval mode.
        lane = lax.broadcasted_iota(jnp.int32, (1, voc_pad), 1)
        masked = jnp.where(lane < voc, logits, jnp.float32(-1e30))
        m = jnp.max(masked, axis=-1, keepdims=True)
        sh = masked - m
        lse = jnp.log(jnp.sum(jnp.exp(sh), axis=-1, keepdims=True))
        logp = (sh - lse).reshape(t_tile, tile_b, voc_pad)
        logits3 = logits.reshape(t_tile, tile_b, voc_pad)

        # store only the real vocab lanes (8x less HBM write traffic).
        out_ref[...] = logp[:, :, :voc].astype(out_ref.dtype)
        nxt_ref[...] = logits3[:, :, :voc].astype(nxt_ref.dtype)

    return kernel


@functools.partial(jax.jit, static_argnames=("has_meme",))
def _label_rnn_run(x_seq, init, w_m2h, b_m2h, w_i2h, b_i2h, w_h2o, b_h2o, *,
                   has_meme):
    """Pad/pack, run the fused Pallas kernel over (T, B, VOC), slice results."""
    T, B, V = x_seq.shape
    H = HIDDEN_SIZE

    # --- adaptive tiling -------------------------------------------------------
    tile_b = min(128, _round_up(B, 8))
    b_pad = _round_up(B, tile_b)
    # Give the "parallel" batch axis >= 2 tiles when the batch allows it so both
    # v7x TensorCores get work (one extra cheap grid step on v5e/v6e).
    if b_pad // tile_b < 2 and tile_b >= 16:
        tile_b = _round_up(tile_b // 2, 8)
        b_pad = _round_up(B, tile_b)
    # Time chunk: largest divisor of T that is <= MAX_T_TILE. Bounds per-block
    # VMEM (v7x-safe) and lets Pallas pipeline x-in / out-writeback across chunks.
    t_tile = max(d for d in range(1, min(T, MAX_T_TILE) + 1) if T % d == 0)

    # --- lane-dense bf16 operands ----------------------------------------------
    x_p = jnp.zeros((T, b_pad, VOC_PAD), jnp.bfloat16)
    x_p = x_p.at[:, :B, :V].set(x_seq.astype(jnp.bfloat16))

    if has_meme:
        M = init.shape[-1]
        init_p = jnp.zeros((b_pad, MEME_PAD), jnp.bfloat16)
        init_p = init_p.at[:B, :M].set(init.astype(jnp.bfloat16))
        w_m2h_p = jnp.zeros((MEME_PAD, H), jnp.bfloat16)
        w_m2h_p = w_m2h_p.at[:M].set(w_m2h.astype(jnp.bfloat16))
    else:
        init_p = jnp.zeros((b_pad, H), jnp.float32)
        init_p = init_p.at[:B].set(init.astype(jnp.float32))
        w_m2h_p = jnp.zeros((MEME_PAD, H), jnp.bfloat16)   # unused placeholder
    b_m2h_p = b_m2h.reshape(1, H).astype(jnp.float32)

    # i2h split: rows [0:H] act on the previous hidden, rows [H:H+V] on the input.
    w_h_p = w_i2h[:H].astype(jnp.bfloat16)                  # (H, H)
    w_i_p = jnp.zeros((VOC_PAD, H), jnp.bfloat16)
    w_i_p = w_i_p.at[:V].set(w_i2h[H:].astype(jnp.bfloat16))
    b_i2h_p = b_i2h.reshape(1, H).astype(jnp.float32)

    w_h2o_p = jnp.zeros((H, VOC_PAD), jnp.bfloat16)
    w_h2o_p = w_h2o_p.at[:, :V].set(w_h2o.astype(jnp.bfloat16))
    b_h2o_p = jnp.zeros((1, VOC_PAD), jnp.float32)
    b_h2o_p = b_h2o_p.at[0, :V].set(b_h2o.astype(jnp.float32))

    grid = (b_pad // tile_b, T // t_tile)
    init_cols = MEME_PAD if has_meme else H

    out_shapes = (
        jax.ShapeDtypeStruct((T, b_pad, V), jnp.float32),   # log-probs
        jax.ShapeDtypeStruct((b_pad, H), jnp.float32),      # final hidden
        jax.ShapeDtypeStruct((T, b_pad, V), jnp.float32),   # next_in (logits)
    )
    in_specs = [
        pl.BlockSpec((t_tile, tile_b, VOC_PAD), lambda b, t: (t, b, 0)),  # x
        pl.BlockSpec((tile_b, init_cols), lambda b, t: (b, 0)),           # meme / h0
        pl.BlockSpec(w_m2h_p.shape, lambda b, t: (0, 0)),   # weights stay resident
        pl.BlockSpec(b_m2h_p.shape, lambda b, t: (0, 0)),   #   in VMEM across the
        pl.BlockSpec(w_h_p.shape, lambda b, t: (0, 0)),     #   whole grid
        pl.BlockSpec(w_i_p.shape, lambda b, t: (0, 0)),
        pl.BlockSpec(b_i2h_p.shape, lambda b, t: (0, 0)),
        pl.BlockSpec(w_h2o_p.shape, lambda b, t: (0, 0)),
        pl.BlockSpec(b_h2o_p.shape, lambda b, t: (0, 0)),
    ]
    out_specs = (
        pl.BlockSpec((t_tile, tile_b, V), lambda b, t: (t, b, 0)),
        pl.BlockSpec((tile_b, H), lambda b, t: (b, 0)),
        pl.BlockSpec((t_tile, tile_b, V), lambda b, t: (t, b, 0)),
    )

    out, hid, nxt = pl.pallas_call(
        _make_kernel(has_meme, V),
        out_shape=out_shapes,
        grid_spec=pltpu.PrefetchScalarGridSpec(
            num_scalar_prefetch=0,
            grid=grid,
            in_specs=in_specs,
            out_specs=out_specs,
            scratch_shapes=[
                pltpu.VMEM((tile_b, H), jnp.float32),           # carried hidden
                pltpu.VMEM((t_tile, tile_b, H), jnp.float32),   # xproj / h history
            ]),
        compiler_params=pltpu.CompilerParams(
            dimension_semantics=("parallel", "arbitrary"),
            vmem_limit_bytes=32 * 1024 * 1024),
    )(x_p, init_p, w_m2h_p, b_m2h_p, w_h_p, w_i_p, b_i2h_p, w_h2o_p, b_h2o_p)

    return out[:, :B], hid[:B], nxt[:, :B]


def label_rnn_sequence(params, x_seq, hidden0=None, meme=None):
    """Batched sequence forward: x_seq is (T, B, VOC); returns (log_probs, hidden_T, logits)."""
    if meme is not None:
        init, has_meme = meme, True
    else:
        if hidden0 is None:
            hidden0 = jnp.zeros((x_seq.shape[1], HIDDEN_SIZE), jnp.float32)
        init, has_meme = hidden0, False
    return _label_rnn_run(
        x_seq, init,
        params["w_m2h"], params["b_m2h"], params["w_i2h"], params["b_i2h"],
        params["w_h2o"], params["b_h2o"], has_meme=has_meme)


def label_rnn_forward(params, inp, hidden, meme=None):
    """Exact analogue of label_RNN.forward(input, hidden, meme) for 1-D tensors."""
    x_seq = jnp.asarray(inp, jnp.float32).reshape(1, 1, -1)
    if meme is not None:
        out, hid, nxt = label_rnn_sequence(
            params, x_seq, meme=jnp.asarray(meme, jnp.float32).reshape(1, -1))
    else:
        out, hid, nxt = label_rnn_sequence(
            params, x_seq, hidden0=jnp.asarray(hidden, jnp.float32).reshape(1, -1))
    return out[0, 0], hid[0], nxt[0, 0]


def init_params(key):
    """nn.Linear-style init; weights stored pre-transposed as (in_features, out_features)."""
    ks = jax.random.split(key, 6)
    H, V, M = HIDDEN_SIZE, VOC_SIZE, MEME_SIZE

    def lin(kw, kb, fan_in, fan_out):
        bound = 1.0 / jnp.sqrt(jnp.float32(fan_in))
        w = jax.random.uniform(kw, (fan_in, fan_out), jnp.float32, -bound, bound)
        b = jax.random.uniform(kb, (fan_out,), jnp.float32, -bound, bound)
        return w, b

    w_m2h, b_m2h = lin(ks[0], ks[1], M, H)
    w_i2h, b_i2h = lin(ks[2], ks[3], H + V, H)   # cat order is (hidden, input)
    w_h2o, b_h2o = lin(ks[4], ks[5], H, V)
    return {"w_m2h": w_m2h, "b_m2h": b_m2h,
            "w_i2h": w_i2h, "b_i2h": b_i2h,
            "w_h2o": w_h2o, "b_h2o": b_h2o}


def _reference_sequence(params, x_seq, hidden0=None, meme=None):
    """Pure-JAX reference mirroring the kernel's bf16-weight / f32-accumulate numerics."""
    bf = lambda a: a.astype(jnp.bfloat16)
    H = HIDDEN_SIZE
    w_h, w_i = bf(params["w_i2h"][:H]), bf(params["w_i2h"][H:])
    w_o = bf(params["w_h2o"])
    if meme is not None:
        h = (jnp.dot(bf(meme), bf(params["w_m2h"]),
                     preferred_element_type=jnp.float32) + params["b_m2h"])
    else:
        h = hidden0.astype(jnp.float32)
    outs, lgs = [], []
    for t in range(x_seq.shape[0]):
        x_t = bf(x_seq[t])
        h = (jnp.dot(bf(h), w_h, preferred_element_type=jnp.float32)
             + jnp.dot(x_t, w_i, preferred_element_type=jnp.float32)
             + params["b_i2h"])
        logits = (jnp.dot(bf(h), w_o, preferred_element_type=jnp.float32)
                  + params["b_h2o"])
        outs.append(jax.nn.log_softmax(logits, axis=-1))
        lgs.append(logits)
    return jnp.stack(outs), h, jnp.stack(lgs)


if __name__ == "__main__":
    key = jax.random.PRNGKey(0)
    kp, kx, kh, km = jax.random.split(key, 4)

    params = init_params(kp)
    T, B = 8, 8
    x_seq = jax.random.normal(kx, (T, B, VOC_SIZE), jnp.float32)
    hidden0 = jax.random.normal(kh, (B, HIDDEN_SIZE), jnp.float32)
    meme = jax.random.normal(km, (B, MEME_SIZE), jnp.float32)

    # batched sequence, hidden initialized from meme via m2h (inside the kernel)
    out_a, hid_a, nxt_a = label_rnn_sequence(params, x_seq, meme=meme)
    # batched sequence, explicit initial hidden
    out_b, hid_b, nxt_b = label_rnn_sequence(params, x_seq, hidden0=hidden0)
    # single-step calls matching the original forward(input, hidden, meme) signature
    out_c, hid_c, nxt_c = label_rnn_forward(params, x_seq[0, 0], hidden0[0], meme=meme[0])
    out_d, hid_d, nxt_d = label_rnn_forward(params, x_seq[0, 0], hidden0[0])
    jax.block_until_ready((out_a, hid_a, nxt_a, out_b, hid_b, nxt_b,
                           out_c, hid_c, nxt_c, out_d, hid_d, nxt_d))

    # correctness checks against the pure-JAX reference
    ra = _reference_sequence(params, x_seq, meme=meme)
    rb = _reference_sequence(params, x_seq, hidden0=hidden0)
    rc = _reference_sequence(params, x_seq[:1, :1], meme=meme[:1])
    rd = _reference_sequence(params, x_seq[:1, :1], hidden0=hidden0[:1])
    checks = [
        (out_a, ra[0]), (hid_a, ra[1]), (nxt_a, ra[2]),
        (out_b, rb[0]), (hid_b, rb[1]), (nxt_b, rb[2]),
        (out_c, rc[0][0, 0]), (hid_c, rc[1][0]), (nxt_c, rc[2][0, 0]),
        (out_d, rd[0][0, 0]), (hid_d, rd[1][0]), (nxt_d, rd[2][0, 0]),
    ]
    for i, (got, want) in enumerate(checks):
        assert jnp.allclose(got, want, atol=1e-2, rtol=1e-2), f"mismatch at check {i}"

    print("KERNEL_OK")
</pallas_src>

<mosaic_0001>
module attributes {stable_mosaic.version = 11 : i64} {
  func.func @kernel(%arg0: i32, %arg1: i32, %arg2: memref<8x8x128xbf16, #tpu.memory_space<vmem>>, %arg3: memref<8x128xbf16, #tpu.memory_space<vmem>>, %arg4: memref<128x128xbf16, #tpu.memory_space<vmem>>, %arg5: memref<1x128xf32, #tpu.memory_space<vmem>>, %arg6: memref<128x128xbf16, #tpu.memory_space<vmem>>, %arg7: memref<128x128xbf16, #tpu.memory_space<vmem>>, %arg8: memref<1x128xf32, #tpu.memory_space<vmem>>, %arg9: memref<128x128xbf16, #tpu.memory_space<vmem>>, %arg10: memref<1x128xf32, #tpu.memory_space<vmem>>, %arg11: memref<8x8x16xf32, #tpu.memory_space<vmem>>, %arg12: memref<8x128xf32, #tpu.memory_space<vmem>>, %arg13: memref<8x8x16xf32, #tpu.memory_space<vmem>>, %arg14: memref<8x128xf32, #tpu.memory_space<vmem>>, %arg15: memref<8x8x128xf32, #tpu.memory_space<vmem>>) attributes {dimension_semantics = [#tpu.dimension_semantics<parallel>, #tpu.dimension_semantics<arbitrary>], iteration_bounds = array<i64: 1, 1>, scalar_prefetch = 0 : i64, scratch_operands = 2 : i64, tpu.core_type = #tpu.core_type<tc>, window_params = [{transform_indices = @transform_0, window_bounds = array<i64: 8, 8, 128>}, {transform_indices = @transform_1, window_bounds = array<i64: 8, 128>}, {pipeline_mode = #tpu.pipeline_mode<synchronous>, transform_indices = @transform_2, window_bounds = array<i64: 128, 128>}, {pipeline_mode = #tpu.pipeline_mode<synchronous>, transform_indices = @transform_3, window_bounds = array<i64: 1, 128>}, {pipeline_mode = #tpu.pipeline_mode<synchronous>, transform_indices = @transform_4, window_bounds = array<i64: 128, 128>}, {pipeline_mode = #tpu.pipeline_mode<synchronous>, transform_indices = @transform_5, window_bounds = array<i64: 128, 128>}, {pipeline_mode = #tpu.pipeline_mode<synchronous>, transform_indices = @transform_6, window_bounds = array<i64: 1, 128>}, {pipeline_mode = #tpu.pipeline_mode<synchronous>, transform_indices = @transform_7, window_bounds = array<i64: 128, 128>}, {pipeline_mode = #tpu.pipeline_mode<synchronous>, transform_indices = @transform_8, window_bounds = array<i64: 1, 128>}, {transform_indices = @transform_9, window_bounds = array<i64: 8, 8, 16>}, {transform_indices = @transform_10, window_bounds = array<i64: 8, 128>}, {transform_indices = @transform_11, window_bounds = array<i64: 8, 8, 16>}]} {
    %c0 = arith.constant 0 : index
    %c0_0 = arith.constant 0 : index
    %0 = vector.load %arg3[%c0, %c0_0] : memref<8x128xbf16, #tpu.memory_space<vmem>>, vector<8x128xbf16>
    %c0_1 = arith.constant 0 : index
    %c0_2 = arith.constant 0 : index
    %1 = vector.load %arg4[%c0_1, %c0_2] : memref<128x128xbf16, #tpu.memory_space<vmem>>, vector<128x128xbf16>
    %cst = arith.constant dense<0.000000e+00> : vector<8x128xf32>
    %2 = tpu.matmul %0, %1, %cst {dimension_numbers = #tpu.dot_dimension_numbers<[1], [0], [0], [1], [0, 0, 1, 1], [], []>} : vector<8x128xbf16>, vector<128x128xbf16>, vector<8x128xf32> -> vector<8x128xf32>
    %c0_3 = arith.constant 0 : index
    %c0_4 = arith.constant 0 : index
    %3 = vector.load %arg5[%c0_3, %c0_4] : memref<1x128xf32, #tpu.memory_space<vmem>>, vector<1x128xf32>
    %4 = vector.broadcast %3 : vector<1x128xf32> to vector<8x128xf32>
    %5 = arith.addf %2, %4 : vector<8x128xf32>
    %c0_i32 = arith.constant 0 : i32
    %6 = arith.cmpi eq, %arg1, %c0_i32 : i32
    %7 = arith.extui %6 : i1 to i32
    %c0_i32_5 = arith.constant 0 : i32
    %8 = arith.cmpi ne, %7, %c0_i32_5 : i32
    scf.if %8 {
      %c0_83 = arith.constant 0 : index
      %c0_84 = arith.constant 0 : index
      %133 = vector.load %arg14[%c0_83, %c0_84] : memref<8x128xf32, #tpu.memory_space<vmem>>, vector<8x128xf32>
      tpu.vector_store %arg14[%c0_83, %c0_84], %5 {strides = array<i32>} : memref<8x128xf32, #tpu.memory_space<vmem>>, vector<8x128xf32>,
    } else {
    }
    %c0_6 = arith.constant 0 : index
    %c0_7 = arith.constant 0 : index
    %c0_8 = arith.constant 0 : index
    %9 = vector.load %arg2[%c0_6, %c0_7, %c0_8] : memref<8x8x128xbf16, #tpu.memory_space<vmem>>, vector<8x8x128xbf16>
    %10 = vector.shape_cast %9 : vector<8x8x128xbf16> to vector<64x128xbf16>
    %c0_9 = arith.constant 0 : index
    %c0_10 = arith.constant 0 : index
    %11 = vector.load %arg7[%c0_9, %c0_10] : memref<128x128xbf16, #tpu.memory_space<vmem>>, vector<128x128xbf16>
    %cst_11 = arith.constant dense<0.000000e+00> : vector<64x128xf32>
    %12 = tpu.matmul %10, %11, %cst_11 {dimension_numbers = #tpu.dot_dimension_numbers<[1], [0], [0], [1], [0, 0, 1, 1], [], []>} : vector<64x128xbf16>, vector<128x128xbf16>, vector<64x128xf32> -> vector<64x128xf32>
    %c0_12 = arith.constant 0 : index
    %c0_13 = arith.constant 0 : index
    %13 = vector.load %arg8[%c0_12, %c0_13] : memref<1x128xf32, #tpu.memory_space<vmem>>, vector<1x128xf32>
    %14 = vector.broadcast %13 : vector<1x128xf32> to vector<64x128xf32>
    %15 = arith.addf %12, %14 : vector<64x128xf32>
    %16 = vector.shape_cast %15 : vector<64x128xf32> to vector<8x8x128xf32>
    %c0_14 = arith.constant 0 : index
    %c0_15 = arith.constant 0 : index
    %c0_16 = arith.constant 0 : index
    %17 = vector.load %arg15[%c0_14, %c0_15, %c0_16] : memref<8x8x128xf32, #tpu.memory_space<vmem>>, vector<8x8x128xf32>
    tpu.vector_store %arg15[%c0_14, %c0_15, %c0_16], %16 {strides = array<i32>} : memref<8x8x128xf32, #tpu.memory_space<vmem>>, vector<8x8x128xf32>,
    %c0_17 = arith.constant 0 : index
    %c0_18 = arith.constant 0 : index
    %18 = vector.load %arg6[%c0_17, %c0_18] : memref<128x128xbf16, #tpu.memory_space<vmem>>, vector<128x128xbf16>
    %c0_19 = arith.constant 0 : index
    %c0_20 = arith.constant 0 : index
    %19 = vector.load %arg14[%c0_19, %c0_20] : memref<8x128xf32, #tpu.memory_space<vmem>>, vector<8x128xf32>
    %c0_i32_21 = arith.constant 0 : i32
    %20 = arith.truncf %19 : vector<8x128xf32> to vector<8x128xbf16>
    %cst_22 = arith.constant dense<0.000000e+00> : vector<8x128xf32>
    %21 = tpu.matmul %20, %18, %cst_22 {dimension_numbers = #tpu.dot_dimension_numbers<[1], [0], [0], [1], [0, 0, 1, 1], [], []>} : vector<8x128xbf16>, vector<128x128xbf16>, vector<8x128xf32> -> vector<8x128xf32>
    %22 = arith.index_cast %c0_i32_21 : i32 to index
    %c0_23 = arith.constant 0 : index
    %c0_24 = arith.constant 0 : index
    %23 = vector.load %arg15[%22, %c0_23, %c0_24] : memref<8x8x128xf32, #tpu.memory_space<vmem>>, vector<1x8x128xf32>
    %24 = vector.shape_cast %23 : vector<1x8x128xf32> to vector<8x128xf32>
    %25 = arith.addf %21, %24 : vector<8x128xf32>
    %26 = arith.index_cast %c0_i32_21 : i32 to index
    %c0_25 = arith.constant 0 : index
    %c0_26 = arith.constant 0 : index
    %27 = vector.load %arg15[%26, %c0_25, %c0_26] : memref<8x8x128xf32, #tpu.memory_space<vmem>>, vector<1x8x128xf32>
    %28 = vector.shape_cast %27 : vector<1x8x128xf32> to vector<8x128xf32>
    %29 = vector.shape_cast %25 : vector<8x128xf32> to vector<1x8x128xf32>
    tpu.vector_store %arg15[%26, %c0_25, %c0_26], %29 {strides = array<i32>} : memref<8x8x128xf32, #tpu.memory_space<vmem>>, vector<1x8x128xf32>,
    %c1_i32 = arith.constant 1 : i32
    %30 = arith.truncf %25 : vector<8x128xf32> to vector<8x128xbf16>
    %cst_27 = arith.constant dense<0.000000e+00> : vector<8x128xf32>
    %31 = tpu.matmul %30, %18, %cst_27 {dimension_numbers = #tpu.dot_dimension_numbers<[1], [0], [0], [1], [0, 0, 1, 1], [], []>} : vector<8x128xbf16>, vector<128x128xbf16>, vector<8x128xf32> -> vector<8x128xf32>
    %32 = arith.index_cast %c1_i32 : i32 to index
    %c0_28 = arith.constant 0 : index
    %c0_29 = arith.constant 0 : index
    %33 = vector.load %arg15[%32, %c0_28, %c0_29] : memref<8x8x128xf32, #tpu.memory_space<vmem>>, vector<1x8x128xf32>
    %34 = vector.shape_cast %33 : vector<1x8x128xf32> to vector<8x128xf32>
    %35 = arith.addf %31, %34 : vector<8x128xf32>
    %36 = arith.index_cast %c1_i32 : i32 to index
    %c0_30 = arith.constant 0 : index
    %c0_31 = arith.constant 0 : index
    %37 = vector.load %arg15[%36, %c0_30, %c0_31] : memref<8x8x128xf32, #tpu.memory_space<vmem>>, vector<1x8x128xf32>
    %38 = vector.shape_cast %37 : vector<1x8x128xf32> to vector<8x128xf32>
    %39 = vector.shape_cast %35 : vector<8x128xf32> to vector<1x8x128xf32>
    tpu.vector_store %arg15[%36, %c0_30, %c0_31], %39 {strides = array<i32>} : memref<8x8x128xf32, #tpu.memory_space<vmem>>, vector<1x8x128xf32>,
    %c2_i32 = arith.constant 2 : i32
    %40 = arith.truncf %35 : vector<8x128xf32> to vector<8x128xbf16>
    %cst_32 = arith.constant dense<0.000000e+00> : vector<8x128xf32>
    %41 = tpu.matmul %40, %18, %cst_32 {dimension_numbers = #tpu.dot_dimension_numbers<[1], [0], [0], [1], [0, 0, 1, 1], [], []>} : vector<8x128xbf16>, vector<128x128xbf16>, vector<8x128xf32> -> vector<8x128xf32>
    %42 = arith.index_cast %c2_i32 : i32 to index
    %c0_33 = arith.constant 0 : index
    %c0_34 = arith.constant 0 : index
    %43 = vector.load %arg15[%42, %c0_33, %c0_34] : memref<8x8x128xf32, #tpu.memory_space<vmem>>, vector<1x8x128xf32>
    %44 = vector.shape_cast %43 : vector<1x8x128xf32> to vector<8x128xf32>
    %45 = arith.addf %41, %44 : vector<8x128xf32>
    %46 = arith.index_cast %c2_i32 : i32 to index
    %c0_35 = arith.constant 0 : index
    %c0_36 = arith.constant 0 : index
    %47 = vector.load %arg15[%46, %c0_35, %c0_36] : memref<8x8x128xf32, #tpu.memory_space<vmem>>, vector<1x8x128xf32>
    %48 = vector.shape_cast %47 : vector<1x8x128xf32> to vector<8x128xf32>
    %49 = vector.shape_cast %45 : vector<8x128xf32> to vector<1x8x128xf32>
    tpu.vector_store %arg15[%46, %c0_35, %c0_36], %49 {strides = array<i32>} : memref<8x8x128xf32, #tpu.memory_space<vmem>>, vector<1x8x128xf32>,
    %c3_i32 = arith.constant 3 : i32
    %50 = arith.truncf %45 : vector<8x128xf32> to vector<8x128xbf16>
    %cst_37 = arith.constant dense<0.000000e+00> : vector<8x128xf32>
    %51 = tpu.matmul %50, %18, %cst_37 {dimension_numbers = #tpu.dot_dimension_numbers<[1], [0], [0], [1], [0, 0, 1, 1], [], []>} : vector<8x128xbf16>, vector<128x128xbf16>, vector<8x128xf32> -> vector<8x128xf32>
    %52 = arith.index_cast %c3_i32 : i32 to index
    %c0_38 = arith.constant 0 : index
    %c0_39 = arith.constant 0 : index
    %53 = vector.load %arg15[%52, %c0_38, %c0_39] : memref<8x8x128xf32, #tpu.memory_space<vmem>>, vector<1x8x128xf32>
    %54 = vector.shape_cast %53 : vector<1x8x128xf32> to vector<8x128xf32>
    %55 = arith.addf %51, %54 : vector<8x128xf32>
    %56 = arith.index_cast %c3_i32 : i32 to index
    %c0_40 = arith.constant 0 : index
    %c0_41 = arith.constant 0 : index
    %57 = vector.load %arg15[%56, %c0_40, %c0_41] : memref<8x8x128xf32, #tpu.memory_space<vmem>>, vector<1x8x128xf32>
    %58 = vector.shape_cast %57 : vector<1x8x128xf32> to vector<8x128xf32>
    %59 = vector.shape_cast %55 : vector<8x128xf32> to vector<1x8x128xf32>
    tpu.vector_store %arg15[%56, %c0_40, %c0_41], %59 {strides = array<i32>} : memref<8x8x128xf32, #tpu.memory_space<vmem>>, vector<1x8x128xf32>,
    %c4_i32 = arith.constant 4 : i32
    %60 = arith.truncf %55 : vector<8x128xf32> to vector<8x128xbf16>
    %cst_42 = arith.constant dense<0.000000e+00> : vector<8x128xf32>
    %61 = tpu.matmul %60, %18, %cst_42 {dimension_numbers = #tpu.dot_dimension_numbers<[1], [0], [0], [1], [0, 0, 1, 1], [], []>} : vector<8x128xbf16>, vector<128x128xbf16>, vector<8x128xf32> -> vector<8x128xf32>
    %62 = arith.index_cast %c4_i32 : i32 to index
    %c0_43 = arith.constant 0 : index
    %c0_44 = arith.constant 0 : index
    %63 = vector.load %arg15[%62, %c0_43, %c0_44] : memref<8x8x128xf32, #tpu.memory_space<vmem>>, vector<1x8x128xf32>
    %64 = vector.shape_cast %63 : vector<1x8x128xf32> to vector<8x128xf32>
    %65 = arith.addf %61, %64 : vector<8x128xf32>
    %66 = arith.index_cast %c4_i32 : i32 to index
    %c0_45 = arith.constant 0 : index
    %c0_46 = arith.constant 0 : index
    %67 = vector.load %arg15[%66, %c0_45, %c0_46] : memref<8x8x128xf32, #tpu.memory_space<vmem>>, vector<1x8x128xf32>
    %68 = vector.shape_cast %67 : vector<1x8x128xf32> to vector<8x128xf32>
    %69 = vector.shape_cast %65 : vector<8x128xf32> to vector<1x8x128xf32>
    tpu.vector_store %arg15[%66, %c0_45, %c0_46], %69 {strides = array<i32>} : memref<8x8x128xf32, #tpu.memory_space<vmem>>, vector<1x8x128xf32>,
    %c5_i32 = arith.constant 5 : i32
    %70 = arith.truncf %65 : vector<8x128xf32> to vector<8x128xbf16>
    %cst_47 = arith.constant dense<0.000000e+00> : vector<8x128xf32>
    %71 = tpu.matmul %70, %18, %cst_47 {dimension_numbers = #tpu.dot_dimension_numbers<[1], [0], [0], [1], [0, 0, 1, 1], [], []>} : vector<8x128xbf16>, vector<128x128xbf16>, vector<8x128xf32> -> vector<8x128xf32>
    %72 = arith.index_cast %c5_i32 : i32 to index
    %c0_48 = arith.constant 0 : index
    %c0_49 = arith.constant 0 : index
    %73 = vector.load %arg15[%72, %c0_48, %c0_49] : memref<8x8x128xf32, #tpu.memory_space<vmem>>, vector<1x8x128xf32>
    %74 = vector.shape_cast %73 : vector<1x8x128xf32> to vector<8x128xf32>
    %75 = arith.addf %71, %74 : vector<8x128xf32>
    %76 = arith.index_cast %c5_i32 : i32 to index
    %c0_50 = arith.constant 0 : index
    %c0_51 = arith.constant 0 : index
    %77 = vector.load %arg15[%76, %c0_50, %c0_51] : memref<8x8x128xf32, #tpu.memory_space<vmem>>, vector<1x8x128xf32>
    %78 = vector.shape_cast %77 : vector<1x8x128xf32> to vector<8x128xf32>
    %79 = vector.shape_cast %75 : vector<8x128xf32> to vector<1x8x128xf32>
    tpu.vector_store %arg15[%76, %c0_50, %c0_51], %79 {strides = array<i32>} : memref<8x8x128xf32, #tpu.memory_space<vmem>>, vector<1x8x128xf32>,
    %c6_i32 = arith.constant 6 : i32
    %80 = arith.truncf %75 : vector<8x128xf32> to vector<8x128xbf16>
    %cst_52 = arith.constant dense<0.000000e+00> : vector<8x128xf32>
    %81 = tpu.matmul %80, %18, %cst_52 {dimension_numbers = #tpu.dot_dimension_numbers<[1], [0], [0], [1], [0, 0, 1, 1], [], []>} : vector<8x128xbf16>, vector<128x128xbf16>, vector<8x128xf32> -> vector<8x128xf32>
    %82 = arith.index_cast %c6_i32 : i32 to index
    %c0_53 = arith.constant 0 : index
    %c0_54 = arith.constant 0 : index
    %83 = vector.load %arg15[%82, %c0_53, %c0_54] : memref<8x8x128xf32, #tpu.memory_space<vmem>>, vector<1x8x128xf32>
    %84 = vector.shape_cast %83 : vector<1x8x128xf32> to vector<8x128xf32>
    %85 = arith.addf %81, %84 : vector<8x128xf32>
    %86 = arith.index_cast %c6_i32 : i32 to index
    %c0_55 = arith.constant 0 : index
    %c0_56 = arith.constant 0 : index
    %87 = vector.load %arg15[%86, %c0_55, %c0_56] : memref<8x8x128xf32, #tpu.memory_space<vmem>>, vector<1x8x128xf32>
    %88 = vector.shape_cast %87 : vector<1x8x128xf32> to vector<8x128xf32>
    %89 = vector.shape_cast %85 : vector<8x128xf32> to vector<1x8x128xf32>
    tpu.vector_store %arg15[%86, %c0_55, %c0_56], %89 {strides = array<i32>} : memref<8x8x128xf32, #tpu.memory_space<vmem>>, vector<1x8x128xf32>,
    %c7_i32 = arith.constant 7 : i32
    %90 = arith.truncf %85 : vector<8x128xf32> to vector<8x128xbf16>
    %cst_57 = arith.constant dense<0.000000e+00> : vector<8x128xf32>
    %91 = tpu.matmul %90, %18, %cst_57 {dimension_numbers = #tpu.dot_dimension_numbers<[1], [0], [0], [1], [0, 0, 1, 1], [], []>} : vector<8x128xbf16>, vector<128x128xbf16>, vector<8x128xf32> -> vector<8x128xf32>
    %92 = arith.index_cast %c7_i32 : i32 to index
    %c0_58 = arith.constant 0 : index
    %c0_59 = arith.constant 0 : index
    %93 = vector.load %arg15[%92, %c0_58, %c0_59] : memref<8x8x128xf32, #tpu.memory_space<vmem>>, vector<1x8x128xf32>
    %94 = vector.shape_cast %93 : vector<1x8x128xf32> to vector<8x128xf32>
    %95 = arith.addf %91, %94 : vector<8x128xf32>
    %96 = arith.index_cast %c7_i32 : i32 to index
    %c0_60 = arith.constant 0 : index
    %c0_61 = arith.constant 0 : index
    %97 = vector.load %arg15[%96, %c0_60, %c0_61] : memref<8x8x128xf32, #tpu.memory_space<vmem>>, vector<1x8x128xf32>
    %98 = vector.shape_cast %97 : vector<1x8x128xf32> to vector<8x128xf32>
    %99 = vector.shape_cast %95 : vector<8x128xf32> to vector<1x8x128xf32>
    tpu.vector_store %arg15[%96, %c0_60, %c0_61], %99 {strides = array<i32>} : memref<8x8x128xf32, #tpu.memory_space<vmem>>, vector<1x8x128xf32>,
    %c8_i32 = arith.constant 8 : i32
    %c0_62 = arith.constant 0 : index
    %c0_63 = arith.constant 0 : index
    %100 = vector.load %arg14[%c0_62, %c0_63] : memref<8x128xf32, #tpu.memory_space<vmem>>, vector<8x128xf32>
    tpu.vector_store %arg14[%c0_62, %c0_63], %95 {strides = array<i32>} : memref<8x128xf32, #tpu.memory_space<vmem>>, vector<8x128xf32>,
    %c0_64 = arith.constant 0 : index
    %c0_65 = arith.constant 0 : index
    %101 = vector.load %arg12[%c0_64, %c0_65] : memref<8x128xf32, #tpu.memory_space<vmem>>, vector<8x128xf32>
    tpu.vector_store %arg12[%c0_64, %c0_65], %95 {strides = array<i32>} : memref<8x128xf32, #tpu.memory_space<vmem>>, vector<8x128xf32>,
    %c0_66 = arith.constant 0 : index
    %c0_67 = arith.constant 0 : index
    %c0_68 = arith.constant 0 : index
    %102 = vector.load %arg15[%c0_66, %c0_67, %c0_68] : memref<8x8x128xf32, #tpu.memory_space<vmem>>, vector<8x8x128xf32>
    %103 = vector.shape_cast %102 : vector<8x8x128xf32> to vector<64x128xf32>
    %104 = arith.truncf %103 : vector<64x128xf32> to vector<64x128xbf16>
    %c0_69 = arith.constant 0 : index
    %c0_70 = arith.constant 0 : index
    %105 = vector.load %arg9[%c0_69, %c0_70] : memref<128x128xbf16, #tpu.memory_space<vmem>>, vector<128x128xbf16>
    %cst_71 = arith.constant dense<0.000000e+00> : vector<64x128xf32>
    %106 = tpu.matmul %104, %105, %cst_71 {dimension_numbers = #tpu.dot_dimension_numbers<[1], [0], [0], [1], [0, 0, 1, 1], [], []>} : vector<64x128xbf16>, vector<128x128xbf16>, vector<64x128xf32> -> vector<64x128xf32>
    %c0_72 = arith.constant 0 : index
    %c0_73 = arith.constant 0 : index
    %107 = vector.load %arg10[%c0_72, %c0_73] : memref<1x128xf32, #tpu.memory_space<vmem>>, vector<1x128xf32>
    %108 = vector.broadcast %107 : vector<1x128xf32> to vector<64x128xf32>
    %109 = arith.addf %106, %108 : vector<64x128xf32>
    %110 = tpu.iota {dimensions = array<i32: 1>} : vector<1x128xi32>
    %c16_i32 = arith.constant 16 : i32
    %111 = vector.broadcast %c16_i32 : i32 to vector<1x128xi32>
    %112 = arith.cmpi slt, %110, %111 : vector<1x128xi32>
    %cst_74 = arith.constant -1.000000e+30 : f32
    %113 = vector.shape_cast %112 : vector<1x128xi1> to vector<1x128xi1>
    %114 = vector.broadcast %113 : vector<1x128xi1> to vector<64x128xi1>
    %115 = vector.broadcast %cst_74 : f32 to vector<64x128xf32>
    %116 = arith.select %114, %109, %115 : vector<64x128xi1>, vector<64x128xf32>
    %cst_75 = arith.constant dense<0xFF800000> : vector<64xf32>
    %117 = vector.multi_reduction <maximumf>, %116, %cst_75 [1] : vector<64x128xf32> to vector<64xf32>
    %118 = vector.shape_cast %117 : vector<64xf32> to vector<64x1xf32>
    %119 = vector.broadcast %118 : vector<64x1xf32> to vector<64x128xf32>
    %120 = arith.subf %116, %119 : vector<64x128xf32>
    %121 = math.exp %120 : vector<64x128xf32>
    %cst_76 = arith.constant dense<0.000000e+00> : vector<64xf32>
    %122 = vector.multi_reduction <add>, %121, %cst_76 [1] : vector<64x128xf32> to vector<64xf32>
    %123 = vector.shape_cast %122 : vector<64xf32> to vector<64x1xf32>
    %124 = math.log %123 : vector<64x1xf32>
    %125 = vector.broadcast %124 : vector<64x1xf32> to vector<64x128xf32>
    %126 = arith.subf %120, %125 : vector<64x128xf32>
    %127 = vector.shape_cast %126 : vector<64x128xf32> to vector<8x8x128xf32>
    %128 = vector.shape_cast %109 : vector<64x128xf32> to vector<8x8x128xf32>
    %129 = vector.extract_strided_slice %127 {offsets = [0, 0, 0], sizes = [8, 8, 16], strides = [1, 1, 1]} : vector<8x8x128xf32> to vector<8x8x16xf32>
    %c0_77 = arith.constant 0 : index
    %c0_78 = arith.constant 0 : index
    %c0_79 = arith.constant 0 : index
    %130 = vector.load %arg11[%c0_77, %c0_78, %c0_79] : memref<8x8x16xf32, #tpu.memory_space<vmem>>, vector<8x8x16xf32>
    tpu.vector_store %arg11[%c0_77, %c0_78, %c0_79], %129 {strides = array<i32>} : memref<8x8x16xf32, #tpu.memory_space<vmem>>, vector<8x8x16xf32>,
    %131 = vector.extract_strided_slice %128 {offsets = [0, 0, 0], sizes = [8, 8, 16], strides = [1, 1, 1]} : vector<8x8x128xf32> to vector<8x8x16xf32>
    %c0_80 = arith.constant 0 : index
    %c0_81 = arith.constant 0 : index
    %c0_82 = arith.constant 0 : index
    %132 = vector.load %arg13[%c0_80, %c0_81, %c0_82] : memref<8x8x16xf32, #tpu.memory_space<vmem>>, vector<8x8x16xf32>
    tpu.vector_store %arg13[%c0_80, %c0_81, %c0_82], %131 {strides = array<i32>} : memref<8x8x16xf32, #tpu.memory_space<vmem>>, vector<8x8x16xf32>,
    return
  }
  func.func @transform_0(%arg0: i32, %arg1: i32) -> (i32, i32, i32) {
    %c0_i32 = arith.constant 0 : i32
    %c0_i32_0 = arith.constant 0 : i32
    return %arg1, %arg0, %c0_i32 : i32, i32, i32
  }
  func.func @transform_1(%arg0: i32, %arg1: i32) -> (i32, i32) {
    %c0_i32 = arith.constant 0 : i32
    %c0_i32_0 = arith.constant 0 : i32
    return %arg0, %c0_i32 : i32, i32
  }
  func.func @transform_2(%arg0: i32, %arg1: i32) -> (i32, i32) {
    %c0_i32 = arith.constant 0 : i32
    %c0_i32_0 = arith.constant 0 : i32
    %c0_i32_1 = arith.constant 0 : i32
    return %c0_i32, %c0_i32_0 : i32, i32
  }
  func.func @transform_3(%arg0: i32, %arg1: i32) -> (i32, i32) {
    %c0_i32 = arith.constant 0 : i32
    %c0_i32_0 = arith.constant 0 : i32
    %c0_i32_1 = arith.constant 0 : i32
    return %c0_i32, %c0_i32_0 : i32, i32
  }
  func.func @transform_4(%arg0: i32, %arg1: i32) -> (i32, i32) {
    %c0_i32 = arith.constant 0 : i32
    %c0_i32_0 = arith.constant 0 : i32
    %c0_i32_1 = arith.constant 0 : i32
    return %c0_i32, %c0_i32_0 : i32, i32
  }
  func.func @transform_5(%arg0: i32, %arg1: i32) -> (i32, i32) {
    %c0_i32 = arith.constant 0 : i32
    %c0_i32_0 = arith.constant 0 : i32
    %c0_i32_1 = arith.constant 0 : i32
    return %c0_i32, %c0_i32_0 : i32, i32
  }
  func.func @transform_6(%arg0: i32, %arg1: i32) -> (i32, i32) {
    %c0_i32 = arith.constant 0 : i32
    %c0_i32_0 = arith.constant 0 : i32
    %c0_i32_1 = arith.constant 0 : i32
    return %c0_i32, %c0_i32_0 : i32, i32
  }
  func.func @transform_7(%arg0: i32, %arg1: i32) -> (i32, i32) {
    %c0_i32 = arith.constant 0 : i32
    %c0_i32_0 = arith.constant 0 : i32
    %c0_i32_1 = arith.constant 0 : i32
    return %c0_i32, %c0_i32_0 : i32, i32
  }
  func.func @transform_8(%arg0: i32, %arg1: i32) -> (i32, i32) {
    %c0_i32 = arith.constant 0 : i32
    %c0_i32_0 = arith.constant 0 : i32
    %c0_i32_1 = arith.constant 0 : i32
    return %c0_i32, %c0_i32_0 : i32, i32
  }
  func.func @transform_9(%arg0: i32, %arg1: i32) -> (i32, i32, i32) {
    %c0_i32 = arith.constant 0 : i32
    %c0_i32_0 = arith.constant 0 : i32
    return %arg1, %arg0, %c0_i32 : i32, i32, i32
  }
  func.func @transform_10(%arg0: i32, %arg1: i32) -> (i32, i32) {
    %c0_i32 = arith.constant 0 : i32
    %c0_i32_0 = arith.constant 0 : i32
    return %arg0, %c0_i32 : i32, i32
  }
  func.func @transform_11(%arg0: i32, %arg1: i32) -> (i32, i32, i32) {
    %c0_i32 = arith.constant 0 : i32
    %c0_i32_0 = arith.constant 0 : i32
    return %arg1, %arg0, %c0_i32 : i32, i32, i32
  }
}

</mosaic_0001>

<llo_original>
// kernel: _label_rnn_run.1
$region0: #{_label_rnn_run.1}
  #allocation0 [shape = 'u32[]', space=smem, size = 0x4, offset = 0x4, fixed_abs, tag = 'smem constant byte address 0x4 - core index']
  #allocation1 [shape = 'u32[144,128]{1,0:T(1,128)}', space=vmem, size = 0x12000, scoped, tag = 'internal scratch']
  #allocation2 [shape = 'f32[8,128]{1,0:T(8,128)}', space=vmem, size = 0x1000, scoped, tag = 'scratch operand']
  #allocation3 [shape = 'f32[8,8,128]{2,1,0:T(8,128)}', space=vmem, size = 0x8000, scoped, tag = 'scratch operand']
  %s0 = inlined_call_operand.vmem [shape: bf16[8,8,128], index: 0, kind: input, shape index: {}]
  %s1 = inlined_call_operand.vmem [shape: bf16[8,128], index: 1, kind: input, shape index: {}]
  %s2 = inlined_call_operand.vmem [shape: bf16[128,128], index: 2, kind: input, shape index: {}]
  %s3 = inlined_call_operand.vmem [shape: f32[1,128], index: 3, kind: input, shape index: {}]
  %s4 = inlined_call_operand.vmem [shape: bf16[128,128], index: 4, kind: input, shape index: {}]
  %s5 = inlined_call_operand.vmem [shape: bf16[128,128], index: 5, kind: input, shape index: {}]
  %s6 = inlined_call_operand.vmem [shape: f32[1,128], index: 6, kind: input, shape index: {}]
  %s7 = inlined_call_operand.vmem [shape: bf16[128,128], index: 7, kind: input, shape index: {}]
  %s8 = inlined_call_operand.vmem [shape: f32[1,128], index: 8, kind: input, shape index: {}]
  %s9 = inlined_call_operand.hbm [shape: f32[8,8,16], index: 9, kind: output, shape index: {0}]
  %s10 = inlined_call_operand.hbm [shape: f32[8,128], index: 10, kind: output, shape index: {1}]
  %s11 = inlined_call_operand.hbm [shape: f32[8,8,16], index: 11, kind: output, shape index: {2}]
  %12 = xla_tuple %s9, %s10, %s11
  %s13 = sld [smem:[#allocation0]]
  $region66: #{_label_rnn_run.1} parent=0
    _
  %s15 = ssub.s32 1, %s13
  %s16 = scalar_select 0, %s15, %s13
  $region1: #{_label_rnn_run.1} parent=0
    #allocation4 [shape = 'u8[32768]{0}', space=vmem, size = 0x8000, scoped, tag = 'output window, operand 0, single buffered']
    #allocation5 [shape = 's32[1]{0}', space=sflag, size = 0x4, scoped, tag = 'scoped memory for _label_rnn_run.1']
    #allocation6 [shape = 'u8[4096]{0}', space=vmem, size = 0x1000, scoped, tag = 'output window, operand 1, single buffered']
    #allocation7 [shape = 's32[1]{0}', space=sflag, size = 0x4, scoped, tag = 'scoped memory for _label_rnn_run.1']
    #allocation8 [shape = 'u8[32768]{0}', space=vmem, size = 0x8000, scoped, tag = 'output window, operand 2, single buffered']
    %17 = vsyncpa [#allocation5], 0
    %18 = vsyncpa [#allocation7], 0
    // Predicated region
    $region2: #{_label_rnn_run.1} parent=1 // pred_check
      _
    $region3: #{_label_rnn_run.1} parent=1 // pred_check_branch
      %20 = sbr.rel (0) target = $region5
    $region4: #{_label_rnn_run.1} parent=1 // pred_region
      _
    $region5: #{_label_rnn_run.1} parent=1 // pred_fallthru
      _
    // Predicated region
    $region6: #{_label_rnn_run.1} parent=1 // pred_check
      _
    $region7: #{_label_rnn_run.1} parent=1 // pred_check_branch
      %22 = sbr.rel (0) target = $region9
    $region8: #{_label_rnn_run.1} parent=1 // pred_region
      _
    $region9: #{_label_rnn_run.1} parent=1 // pred_fallthru
      _
    // Predicated region
    $region10: #{_label_rnn_run.1} parent=1 // pred_check
      _
    $region11: #{_label_rnn_run.1} parent=1 // pred_check_branch
      %24 = sbr.rel (0) target = $region13
    $region12: #{_label_rnn_run.1} parent=1 // pred_region
      _
    $region13: #{_label_rnn_run.1} parent=1 // pred_fallthru
      _
    // Predicated region
    $region14: #{_label_rnn_run.1} parent=1 // pred_check
      _
    $region15: #{_label_rnn_run.1} parent=1 // pred_check_branch
      %26 = sbr.rel (0) target = $region17
    $region16: #{_label_rnn_run.1} parent=1 // pred_region
      _
    $region17: #{_label_rnn_run.1} parent=1 // pred_fallthru
      _
    // Predicated region
    $region18: #{_label_rnn_run.1} parent=1 // pred_check
      _
    $region19: #{_label_rnn_run.1} parent=1 // pred_check_branch
      %28 = sbr.rel (0) target = $region21
    $region20: #{_label_rnn_run.1} parent=1 // pred_region
      _
    $region21: #{_label_rnn_run.1} parent=1 // pred_fallthru
      _
    // Predicated region
    $region22: #{_label_rnn_run.1} parent=1 // pred_check
      _
    $region23: #{_label_rnn_run.1} parent=1 // pred_check_branch
      %30 = sbr.rel (0) target = $region25
    $region24: #{_label_rnn_run.1} parent=1 // pred_region
      _
    $region25: #{_label_rnn_run.1} parent=1 // pred_fallthru
      _
    // Predicated region
    $region26: #{_label_rnn_run.1} parent=1 // pred_check
      _
    $region27: #{_label_rnn_run.1} parent=1 // pred_check_branch
      %32 = sbr.rel (0) target = $region29
    $region28: #{_label_rnn_run.1} parent=1 // pred_region
      _
    $region29: #{_label_rnn_run.1} parent=1 // pred_fallthru
      _
    // Predicated region
    $region30: #{_label_rnn_run.1} parent=1 // pred_check
      _
    $region31: #{_label_rnn_run.1} parent=1 // pred_check_branch
      %34 = sbr.rel (0) target = $region33
    $region32: #{_label_rnn_run.1} parent=1 // pred_region
      _
    $region33: #{_label_rnn_run.1} parent=1 // pred_fallthru
      _
    // Predicated region
    $region34: #{_label_rnn_run.1} parent=1 // pred_check
      _
    $region35: #{_label_rnn_run.1} parent=1 // pred_check_branch
      %36 = sbr.rel (0) target = $region37
    $region36: #{_label_rnn_run.1} parent=1 // pred_region
      _
    $region37: #{_label_rnn_run.1} parent=1 // pred_fallthru
      _
    %v38 = vld [vmem:[%s1] sm:$0xf]
    %v39 = vld [vmem:[%s2] sm:$0xf]
    %v40 = vld [vmem:[%s2 + $0x4] sm:$0xf]
    %v41 = vld [vmem:[%s2 + $0x8] sm:$0xf]
    %v42 = vld [vmem:[%s2 + $0xc] sm:$0xf]
    %v43 = vld [vmem:[%s2 + $0x10] sm:$0xf]
    %v44 = vld [vmem:[%s2 + $0x14] sm:$0xf]
    %v45 = vld [vmem:[%s2 + $0x18] sm:$0xf]
    %v46 = vld [vmem:[%s2 + $0x1c] sm:$0xf]
    %v47 = vld [vmem:[%s2 + $0x20] sm:$0xf]
    %v48 = vld [vmem:[%s2 + $0x24] sm:$0xf]
    %v49 = vld [vmem:[%s2 + $0x28] sm:$0xf]
    %v50 = vld [vmem:[%s2 + $0x2c] sm:$0xf]
    %v51 = vld [vmem:[%s2 + $0x30] sm:$0xf]
    %v52 = vld [vmem:[%s2 + $0x34] sm:$0xf]
    %v53 = vld [vmem:[%s2 + $0x38] sm:$0xf]
    %v54 = vld [vmem:[%s2 + $0x3c] sm:$0xf]
    %v55 = vld [vmem:[%s3] sm:$0x1]
    %v57 = vlaneseq
    %v58 = vshrl.u32 %v57, 7
    %v59 = vsub.s32 0, %v58
    %v60 = vrot.slane %v55, %v59
    %v78 = vunpack.c.l.b16 %v39
    %v79 = vunpack.c.l.b16 %v40
    %v80 = vunpack.c.l.b16 %v41
    %v81 = vunpack.c.l.b16 %v42
    %v82 = vunpack.c.l.b16 %v43
    %v83 = vunpack.c.l.b16 %v44
    %v84 = vunpack.c.l.b16 %v45
    %v85 = vunpack.c.l.b16 %v46
    %v86 = vunpack.c.l.b16 %v47
    %v87 = vunpack.c.l.b16 %v48
    %v88 = vunpack.c.l.b16 %v49
    %v89 = vunpack.c.l.b16 %v50
    %v90 = vunpack.c.l.b16 %v51
    %v91 = vunpack.c.l.b16 %v52
    %v92 = vunpack.c.l.b16 %v53
    %v93 = vunpack.c.l.b16 %v54
    %v94 = vpack.c.b16 %v79, %v78
    %v95 = vpack.c.b16 %v81, %v80
    %v96 = vpack.c.b16 %v83, %v82
    %v97 = vpack.c.b16 %v85, %v84
    %v98 = vpack.c.b16 %v87, %v86
    %v99 = vpack.c.b16 %v89, %v88
    %v100 = vpack.c.b16 %v91, %v90
    %v101 = vpack.c.b16 %v93, %v92
    %110 = vmatprep.subr.bf16.mxu0 0
    %111 = vmatpush1.bf16.msra.mxu0 %v94
    %112 = vmatprep.subr.bf16.mxu0 0
    %113 = vmatpush1.bf16.msra.mxu0 %v95
    %114 = vmatprep.subr.bf16.mxu0 0
    %115 = vmatpush1.bf16.msra.mxu0 %v96
    %116 = vmatprep.subr.bf16.mxu0 0
    %117 = vmatpush1.bf16.msra.mxu0 %v97
    %118 = vmatprep.subr.bf16.mxu0 0
    %119 = vmatpush1.bf16.msra.mxu0 %v98
    %120 = vmatprep.subr.bf16.mxu0 0
    %121 = vmatpush1.bf16.msra.mxu0 %v99
    %122 = vmatprep.subr.bf16.mxu0 0
    %123 = vmatpush1.bf16.msra.mxu0 %v100
    %124 = vmatprep.subr.bf16.mxu0 0
    %125 = vmatpush1.bf16.msra.mxu0 %v101
    %126 = vmatprep.subr.bf16.mxu0 0
    %127 = vmatpush1.bf16.msra.mxu0 0
    %128 = vmatprep.subr.bf16.mxu0 0
    %129 = vmatpush1.bf16.msra.mxu0 0
    %130 = vmatprep.subr.bf16.mxu0 0
    %131 = vmatpush1.bf16.msra.mxu0 0
    %132 = vmatprep.subr.bf16.mxu0 0
    %133 = vmatpush1.bf16.msra.mxu0 0
    %134 = vmatprep.subr.bf16.mxu0 0
    %135 = vmatpush1.bf16.msra.mxu0 0
    %136 = vmatprep.subr.bf16.mxu0 0
    %137 = vmatpush1.bf16.msra.mxu0 0
    %138 = vmatprep.subr.bf16.mxu0 0
    %139 = vmatpush1.bf16.msra.mxu0 0
    %140 = vmatprep.subr.bf16.mxu0 0
    %141 = vmatpush1.bf16.msra.mxu0 0
    %142 = vmatprep.mubr.bf16.mxu0 0
    %143 = vmatmul.mubr.bf16.gmra.mrb[0].mxu0 %v38
    %v144 = vpop.f32.mrb[0].mxu0
    %v145 = vadd.f32 %v60, %v144
    %v146 = vpop.f32.mrb[0].mxu0
    %v147 = vpop.f32.mrb[0].mxu0
    %v148 = vpop.f32.mrb[0].mxu0
    %149 = vdwg.mxu0
    %p150 = scmp.eq.s32.totalorder 0, 0
    // Predicated region
    $region38: #{_label_rnn_run.1} parent=1 // pred_check
      %p151 = pneg %p150
    $region39: #{_label_rnn_run.1} parent=1 // pred_check_branch
      %153 = sbr.rel (%p151) target = $region41
    $region40: #{_label_rnn_run.1} parent=1 // pred_region
      %154 = vst [vmem:[#allocation2] sm:$0xff] %v145
    $region41: #{_label_rnn_run.1} parent=1 // pred_fallthru
      _
    %v155 = vld [vmem:[%s0] sm:$0xf]
    %v156 = vld [vmem:[%s0 + $0x4] sm:$0xf]
    %v157 = vld [vmem:[%s0 + $0x8] sm:$0xf]
    %v158 = vld [vmem:[%s0 + $0xc] sm:$0xf]
    %v159 = vld [vmem:[%s0 + $0x10] sm:$0xf]
    %v160 = vld [vmem:[%s0 + $0x14] sm:$0xf]
    %v161 = vld [vmem:[%s0 + $0x18] sm:$0xf]
    %v162 = vld [vmem:[%s0 + $0x1c] sm:$0xf]
    %v163 = vld [vmem:[%s5] sm:$0xf]
    %v164 = vld [vmem:[%s5 + $0x4] sm:$0xf]
    %v165 = vld [vmem:[%s5 + $0x8] sm:$0xf]
    %v166 = vld [vmem:[%s5 + $0xc] sm:$0xf]
    %v167 = vld [vmem:[%s5 + $0x10] sm:$0xf]
    %v168 = vld [vmem:[%s5 + $0x14] sm:$0xf]
    %v169 = vld [vmem:[%s5 + $0x18] sm:$0xf]
    %v170 = vld [vmem:[%s5 + $0x1c] sm:$0xf]
    %v171 = vld [vmem:[%s5 + $0x20] sm:$0xf]
    %v172 = vld [vmem:[%s5 + $0x24] sm:$0xf]
    %v173 = vld [vmem:[%s5 + $0x28] sm:$0xf]
    %v174 = vld [vmem:[%s5 + $0x2c] sm:$0xf]
    %v175 = vld [vmem:[%s5 + $0x30] sm:$0xf]
    %v176 = vld [vmem:[%s5 + $0x34] sm:$0xf]
    %v177 = vld [vmem:[%s5 + $0x38] sm:$0xf]
    %v178 = vld [vmem:[%s5 + $0x3c] sm:$0xf]
    %v179 = vld [vmem:[%s6] sm:$0x1]
    %v181 = vlaneseq
    %v182 = vshrl.u32 %v181, 7
    %v183 = vsub.s32 0, %v182
    %v184 = vrot.slane %v179, %v183
    %v194 = vunpack.c.l.b16 %v155
    %v195 = vunpack.c.l.b16 %v156
    %v196 = vunpack.c.l.b16 %v157
    %v197 = vunpack.c.l.b16 %v158
    %v198 = vunpack.c.l.b16 %v159
    %v199 = vunpack.c.l.b16 %v160
    %v200 = vunpack.c.l.b16 %v161
    %v201 = vunpack.c.l.b16 %v162
    %v202 = vpack.c.b16 %v195, %v194
    %v203 = vpack.c.b16 %v197, %v196
    %v204 = vpack.c.b16 %v199, %v198
    %v205 = vpack.c.b16 %v201, %v200
    %v226 = vunpack.c.l.b16 %v163
    %v227 = vunpack.c.l.b16 %v164
    %v228 = vunpack.c.l.b16 %v165
    %v229 = vunpack.c.l.b16 %v166
    %v230 = vunpack.c.l.b16 %v167
    %v231 = vunpack.c.l.b16 %v168
    %v232 = vunpack.c.l.b16 %v169
    %v233 = vunpack.c.l.b16 %v170
    %v234 = vunpack.c.l.b16 %v171
    %v235 = vunpack.c.l.b16 %v172
    %v236 = vunpack.c.l.b16 %v173
    %v237 = vunpack.c.l.b16 %v174
    %v238 = vunpack.c.l.b16 %v175
    %v239 = vunpack.c.l.b16 %v176
    %v240 = vunpack.c.l.b16 %v177
    %v241 = vunpack.c.l.b16 %v178
    %v242 = vpack.c.b16 %v227, %v226
    %v243 = vpack.c.b16 %v229, %v228
    %v244 = vpack.c.b16 %v231, %v230
    %v245 = vpack.c.b16 %v233, %v232
    %v246 = vpack.c.b16 %v235, %v234
    %v247 = vpack.c.b16 %v237, %v236
    %v248 = vpack.c.b16 %v239, %v238
    %v249 = vpack.c.b16 %v241, %v240
    %258 = vmatprep.subr.bf16.mxu0 0
    %259 = vmatpush1.bf16.msra.mxu0 %v242
    %260 = vmatprep.subr.bf16.mxu0 0
    %261 = vmatpush1.bf16.msra.mxu0 %v243
    %262 = vmatprep.subr.bf16.mxu0 0
    %263 = vmatpush1.bf16.msra.mxu0 %v244
    %264 = vmatprep.subr.bf16.mxu0 0
    %265 = vmatpush1.bf16.msra.mxu0 %v245
    %266 = vmatprep.subr.bf16.mxu0 0
    %267 = vmatpush1.bf16.msra.mxu0 %v246
    %268 = vmatprep.subr.bf16.mxu0 0
    %269 = vmatpush1.bf16.msra.mxu0 %v247
    %270 = vmatprep.subr.bf16.mxu0 0
    %271 = vmatpush1.bf16.msra.mxu0 %v248
    %272 = vmatprep.subr.bf16.mxu0 0
    %273 = vmatpush1.bf16.msra.mxu0 %v249
    %274 = vmatprep.subr.bf16.mxu0 0
    %275 = vmatpush1.bf16.msra.mxu0 0
    %276 = vmatprep.subr.bf16.mxu0 0
    %277 = vmatpush1.bf16.msra.mxu0 0
    %278 = vmatprep.subr.bf16.mxu0 0
    %279 = vmatpush1.bf16.msra.mxu0 0
    %280 = vmatprep.subr.bf16.mxu0 0
    %281 = vmatpush1.bf16.msra.mxu0 0
    %282 = vmatprep.subr.bf16.mxu0 0
    %283 = vmatpush1.bf16.msra.mxu0 0
    %284 = vmatprep.subr.bf16.mxu0 0
    %285 = vmatpush1.bf16.msra.mxu0 0
    %286 = vmatprep.subr.bf16.mxu0 0
    %287 = vmatpush1.bf16.msra.mxu0 0
    %288 = vmatprep.subr.bf16.mxu0 0
    %289 = vmatpush1.bf16.msra.mxu0 0
    %290 = vmatprep.mubr.bf16.mxu0 0
    %291 = vmatmul.mubr.bf16.gmra.mrb[0].mxu0 %v202
    %v292 = vpop.f32.mrb[0].mxu0
    %v293 = vadd.f32 %v184, %v292
    %v294 = vpop.f32.mrb[0].mxu0
    %v295 = vpop.f32.mrb[0].mxu0
    %v296 = vadd.f32 %v184, %v295
    %v297 = vpop.f32.mrb[0].mxu0
    %298 = vmatprep.mubr.bf16.mxu0 0
    %299 = vmatmul.mubr.bf16.gmra.mrb[0].mxu0 %v203
    %v300 = vpop.f32.mrb[0].mxu0
    %v301 = vadd.f32 %v184, %v300
    %v302 = vpop.f32.mrb[0].mxu0
    %v303 = vpop.f32.mrb[0].mxu0
    %v304 = vadd.f32 %v184, %v303
    %v305 = vpop.f32.mrb[0].mxu0
    %306 = vmatprep.mubr.bf16.mxu0 0
    %307 = vmatmul.mubr.bf16.gmra.mrb[0].mxu0 %v204
    %v308 = vpop.f32.mrb[0].mxu0
    %v309 = vadd.f32 %v184, %v308
    %v310 = vpop.f32.mrb[0].mxu0
    %v311 = vpop.f32.mrb[0].mxu0
    %v312 = vadd.f32 %v184, %v311
    %v313 = vpop.f32.mrb[0].mxu0
    %314 = vmatprep.mubr.bf16.mxu0 0
    %315 = vmatmul.mubr.bf16.gmra.mrb[0].mxu0 %v205
    %v316 = vpop.f32.mrb[0].mxu0
    %v317 = vadd.f32 %v184, %v316
    %v318 = vpop.f32.mrb[0].mxu0
    %v319 = vpop.f32.mrb[0].mxu0
    %v320 = vadd.f32 %v184, %v319
    %v321 = vpop.f32.mrb[0].mxu0
    %322 = vdwg.mxu0
    %323 = vst [vmem:[#allocation3] sm:$0xff] %v293
    %324 = vst [vmem:[#allocation3 + $0x8] sm:$0xff] %v296
    %325 = vst [vmem:[#allocation3 + $0x10] sm:$0xff] %v301
    %326 = vst [vmem:[#allocation3 + $0x18] sm:$0xff] %v304
    %327 = vst [vmem:[#allocation3 + $0x20] sm:$0xff] %v309
    %328 = vst [vmem:[#allocation3 + $0x28] sm:$0xff] %v312
    %329 = vst [vmem:[#allocation3 + $0x30] sm:$0xff] %v317
    %330 = vst [vmem:[#allocation3 + $0x38] sm:$0xff] %v320
    %v331 = vld [vmem:[%s4] sm:$0xf]
    %v332 = vld [vmem:[%s4 + $0x4] sm:$0xf]
    %v333 = vld [vmem:[%s4 + $0x8] sm:$0xf]
    %v334 = vld [vmem:[%s4 + $0xc] sm:$0xf]
    %v335 = vld [vmem:[%s4 + $0x10] sm:$0xf]
    %v336 = vld [vmem:[%s4 + $0x14] sm:$0xf]
    %v337 = vld [vmem:[%s4 + $0x18] sm:$0xf]
    %v338 = vld [vmem:[%s4 + $0x1c] sm:$0xf]
    %v339 = vld [vmem:[%s4 + $0x20] sm:$0xf]
    %v340 = vld [vmem:[%s4 + $0x24] sm:$0xf]
    %v341 = vld [vmem:[%s4 + $0x28] sm:$0xf]
    %v342 = vld [vmem:[%s4 + $0x2c] sm:$0xf]
    %v343 = vld [vmem:[%s4 + $0x30] sm:$0xf]
    %v344 = vld [vmem:[%s4 + $0x34] sm:$0xf]
    %v345 = vld [vmem:[%s4 + $0x38] sm:$0xf]
    %v346 = vld [vmem:[%s4 + $0x3c] sm:$0xf]
    %v347 = vld [vmem:[#allocation2] sm:$0xff]
    %v348 = vpack.c.bf16 %v347, %v347
    %v349 = vld [vmem:[#allocation3] sm:$0xff]
    %v366 = vunpack.c.l.b16 %v331
    %v367 = vunpack.c.l.b16 %v332
    %v368 = vunpack.c.l.b16 %v333
    %v369 = vunpack.c.l.b16 %v334
    %v370 = vunpack.c.l.b16 %v335
    %v371 = vunpack.c.l.b16 %v336
    %v372 = vunpack.c.l.b16 %v337
    %v373 = vunpack.c.l.b16 %v338
    %v374 = vunpack.c.l.b16 %v339
    %v375 = vunpack.c.l.b16 %v340
    %v376 = vunpack.c.l.b16 %v341
    %v377 = vunpack.c.l.b16 %v342
    %v378 = vunpack.c.l.b16 %v343
    %v379 = vunpack.c.l.b16 %v344
    %v380 = vunpack.c.l.b16 %v345
    %v381 = vunpack.c.l.b16 %v346
    %v382 = vpack.c.b16 %v367, %v366
    %v383 = vpack.c.b16 %v369, %v368
    %v384 = vpack.c.b16 %v371, %v370
    %v385 = vpack.c.b16 %v373, %v372
    %v386 = vpack.c.b16 %v375, %v374
    %v387 = vpack.c.b16 %v377, %v376
    %v388 = vpack.c.b16 %v379, %v378
    %v389 = vpack.c.b16 %v381, %v380
    %398 = vmatprep.subr.bf16.mxu0 0
    %399 = vmatpush1.bf16.msra.mxu0 %v382
    %400 = vmatprep.subr.bf16.mxu0 0
    %401 = vmatpush1.bf16.msra.mxu0 %v383
    %402 = vmatprep.subr.bf16.mxu0 0
    %403 = vmatpush1.bf16.msra.mxu0 %v384
    %404 = vmatprep.subr.bf16.mxu0 0
    %405 = vmatpush1.bf16.msra.mxu0 %v385
    %406 = vmatprep.subr.bf16.mxu0 0
    %407 = vmatpush1.bf16.msra.mxu0 %v386
    %408 = vmatprep.subr.bf16.mxu0 0
    %409 = vmatpush1.bf16.msra.mxu0 %v387
    %410 = vmatprep.subr.bf16.mxu0 0
    %411 = vmatpush1.bf16.msra.mxu0 %v388
    %412 = vmatprep.subr.bf16.mxu0 0
    %413 = vmatpush1.bf16.msra.mxu0 %v389
    %414 = vmatprep.subr.bf16.mxu0 0
    %415 = vmatpush1.bf16.msra.mxu0 0
    %416 = vmatprep.subr.bf16.mxu0 0
    %417 = vmatpush1.bf16.msra.mxu0 0
    %418 = vmatprep.subr.bf16.mxu0 0
    %419 = vmatpush1.bf16.msra.mxu0 0
    %420 = vmatprep.subr.bf16.mxu0 0
    %421 = vmatpush1.bf16.msra.mxu0 0
    %422 = vmatprep.subr.bf16.mxu0 0
    %423 = vmatpush1.bf16.msra.mxu0 0
    %424 = vmatprep.subr.bf16.mxu0 0
    %425 = vmatpush1.bf16.msra.mxu0 0
    %426 = vmatprep.subr.bf16.mxu0 0
    %427 = vmatpush1.bf16.msra.mxu0 0
    %428 = vmatprep.subr.bf16.mxu0 0
    %429 = vmatpush1.bf16.msra.mxu0 0
    %430 = vmatprep.mubr.bf16.mxu0 0
    %431 = vmatmul.mubr.bf16.gmra.mrb[0].mxu0 %v348
    %v432 = vpop.f32.mrb[0].mxu0
    %v433 = vadd.f32 %v349, %v432
    %v434 = vpop.f32.mrb[0].mxu0
    %v435 = vpop.f32.mrb[0].mxu0
    %v436 = vpop.f32.mrb[0].mxu0
    %437 = vdwg.mxu0
    %438 = vst [vmem:[#allocation3] sm:$0xff] %v433
    %v439 = vpack.c.bf16 %v433, %v433
    %s440 = scalar_lea.vmem [#allocation3], 8
    %v441 = vld [vmem:[%s440] sm:$0xff]
    %442 = vmatprep.subr.bf16.mxu0 0
    %443 = vmatpush1.bf16.msra.mxu0 %v382
    %444 = vmatprep.subr.bf16.mxu0 0
    %445 = vmatpush1.bf16.msra.mxu0 %v383
    %446 = vmatprep.subr.bf16.mxu0 0
    %447 = vmatpush1.bf16.msra.mxu0 %v384
    %448 = vmatprep.subr.bf16.mxu0 0
    %449 = vmatpush1.bf16.msra.mxu0 %v385
    %450 = vmatprep.subr.bf16.mxu0 0
    %451 = vmatpush1.bf16.msra.mxu0 %v386
    %452 = vmatprep.subr.bf16.mxu0 0
    %453 = vmatpush1.bf16.msra.mxu0 %v387
    %454 = vmatprep.subr.bf16.mxu0 0
    %455 = vmatpush1.bf16.msra.mxu0 %v388
    %456 = vmatprep.subr.bf16.mxu0 0
    %457 = vmatpush1.bf16.msra.mxu0 %v389
    %458 = vmatprep.subr.bf16.mxu0 0
    %459 = vmatpush1.bf16.msra.mxu0 0
    %460 = vmatprep.subr.bf16.mxu0 0
    %461 = vmatpush1.bf16.msra.mxu0 0
    %462 = vmatprep.subr.bf16.mxu0 0
    %463 = vmatpush1.bf16.msra.mxu0 0
    %464 = vmatprep.subr.bf16.mxu0 0
    %465 = vmatpush1.bf16.msra.mxu0 0
    %466 = vmatprep.subr.bf16.mxu0 0
    %467 = vmatpush1.bf16.msra.mxu0 0
    %468 = vmatprep.subr.bf16.mxu0 0
    %469 = vmatpush1.bf16.msra.mxu0 0
    %470 = vmatprep.subr.bf16.mxu0 0
    %471 = vmatpush1.bf16.msra.mxu0 0
    %472 = vmatprep.subr.bf16.mxu0 0
    %473 = vmatpush1.bf16.msra.mxu0 0
    %474 = vmatprep.mubr.bf16.mxu0 0
    %475 = vmatmul.mubr.bf16.gmra.mrb[0].mxu0 %v439
    %v476 = vpop.f32.mrb[0].mxu0
    %v477 = vadd.f32 %v441, %v476
    %v478 = vpop.f32.mrb[0].mxu0
    %v479 = vpop.f32.mrb[0].mxu0
    %v480 = vpop.f32.mrb[0].mxu0
    %481 = vdwg.mxu0
    %482 = vst [vmem:[%s440] sm:$0xff] %v477
    %v483 = vpack.c.bf16 %v477, %v477
    %s484 = scalar_lea.vmem [#allocation3], 16
    %v485 = vld [vmem:[%s484] sm:$0xff]
    %486 = vmatprep.subr.bf16.mxu0 0
    %487 = vmatpush1.bf16.msra.mxu0 %v382
    %488 = vmatprep.subr.bf16.mxu0 0
    %489 = vmatpush1.bf16.msra.mxu0 %v383
    %490 = vmatprep.subr.bf16.mxu0 0
    %491 = vmatpush1.bf16.msra.mxu0 %v384
    %492 = vmatprep.subr.bf16.mxu0 0
    %493 = vmatpush1.bf16.msra.mxu0 %v385
    %494 = vmatprep.subr.bf16.mxu0 0
    %495 = vmatpush1.bf16.msra.mxu0 %v386
    %496 = vmatprep.subr.bf16.mxu0 0
    %497 = vmatpush1.bf16.msra.mxu0 %v387
    %498 = vmatprep.subr.bf16.mxu0 0
    %499 = vmatpush1.bf16.msra.mxu0 %v388
    %500 = vmatprep.subr.bf16.mxu0 0
    %501 = vmatpush1.bf16.msra.mxu0 %v389
    %502 = vmatprep.subr.bf16.mxu0 0
    %503 = vmatpush1.bf16.msra.mxu0 0
    %504 = vmatprep.subr.bf16.mxu0 0
    %505 = vmatpush1.bf16.msra.mxu0 0
    %506 = vmatprep.subr.bf16.mxu0 0
    %507 = vmatpush1.bf16.msra.mxu0 0
    %508 = vmatprep.subr.bf16.mxu0 0
    %509 = vmatpush1.bf16.msra.mxu0 0
    %510 = vmatprep.subr.bf16.mxu0 0
    %511 = vmatpush1.bf16.msra.mxu0 0
    %512 = vmatprep.subr.bf16.mxu0 0
    %513 = vmatpush1.bf16.msra.mxu0 0
    %514 = vmatprep.subr.bf16.mxu0 0
    %515 = vmatpush1.bf16.msra.mxu0 0
    %516 = vmatprep.subr.bf16.mxu0 0
    %517 = vmatpush1.bf16.msra.mxu0 0
    %518 = vmatprep.mubr.bf16.mxu0 0
    %519 = vmatmul.mubr.bf16.gmra.mrb[0].mxu0 %v483
    %v520 = vpop.f32.mrb[0].mxu0
    %v521 = vadd.f32 %v485, %v520
    %v522 = vpop.f32.mrb[0].mxu0
    %v523 = vpop.f32.mrb[0].mxu0
    %v524 = vpop.f32.mrb[0].mxu0
    %525 = vdwg.mxu0
    %526 = vst [vmem:[%s484] sm:$0xff] %v521
    %v527 = vpack.c.bf16 %v521, %v521
    %s528 = scalar_lea.vmem [#allocation3], 24
    %v529 = vld [vmem:[%s528] sm:$0xff]
    %530 = vmatprep.subr.bf16.mxu0 0
    %531 = vmatpush1.bf16.msra.mxu0 %v382
    %532 = vmatprep.subr.bf16.mxu0 0
    %533 = vmatpush1.bf16.msra.mxu0 %v383
    %534 = vmatprep.subr.bf16.mxu0 0
    %535 = vmatpush1.bf16.msra.mxu0 %v384
    %536 = vmatprep.subr.bf16.mxu0 0
    %537 = vmatpush1.bf16.msra.mxu0 %v385
    %538 = vmatprep.subr.bf16.mxu0 0
    %539 = vmatpush1.bf16.msra.mxu0 %v386
    %540 = vmatprep.subr.bf16.mxu0 0
    %541 = vmatpush1.bf16.msra.mxu0 %v387
    %542 = vmatprep.subr.bf16.mxu0 0
    %543 = vmatpush1.bf16.msra.mxu0 %v388
    %544 = vmatprep.subr.bf16.mxu0 0
    %545 = vmatpush1.bf16.msra.mxu0 %v389
    %546 = vmatprep.subr.bf16.mxu0 0
    %547 = vmatpush1.bf16.msra.mxu0 0
    %548 = vmatprep.subr.bf16.mxu0 0
    %549 = vmatpush1.bf16.msra.mxu0 0
    %550 = vmatprep.subr.bf16.mxu0 0
    %551 = vmatpush1.bf16.msra.mxu0 0
    %552 = vmatprep.subr.bf16.mxu0 0
    %553 = vmatpush1.bf16.msra.mxu0 0
    %554 = vmatprep.subr.bf16.mxu0 0
    %555 = vmatpush1.bf16.msra.mxu0 0
    %556 = vmatprep.subr.bf16.mxu0 0
    %557 = vmatpush1.bf16.msra.mxu0 0
    %558 = vmatprep.subr.bf16.mxu0 0
    %559 = vmatpush1.bf16.msra.mxu0 0
    %560 = vmatprep.subr.bf16.mxu0 0
    %561 = vmatpush1.bf16.msra.mxu0 0
    %562 = vmatprep.mubr.bf16.mxu0 0
    %563 = vmatmul.mubr.bf16.gmra.mrb[0].mxu0 %v527
    %v564 = vpop.f32.mrb[0].mxu0
    %v565 = vadd.f32 %v529, %v564
    %v566 = vpop.f32.mrb[0].mxu0
    %v567 = vpop.f32.mrb[0].mxu0
    %v568 = vpop.f32.mrb[0].mxu0
    %569 = vdwg.mxu0
    %570 = vst [vmem:[%s528] sm:$0xff] %v565
    %v571 = vpack.c.bf16 %v565, %v565
    %s572 = scalar_lea.vmem [#allocation3], 32
    %v573 = vld [vmem:[%s572] sm:$0xff]
    %574 = vmatprep.subr.bf16.mxu0 0
    %575 = vmatpush1.bf16.msra.mxu0 %v382
    %576 = vmatprep.subr.bf16.mxu0 0
    %577 = vmatpush1.bf16.msra.mxu0 %v383
    %578 = vmatprep.subr.bf16.mxu0 0
    %579 = vmatpush1.bf16.msra.mxu0 %v384
    %580 = vmatprep.subr.bf16.mxu0 0
    %581 = vmatpush1.bf16.msra.mxu0 %v385
    %582 = vmatprep.subr.bf16.mxu0 0
    %583 = vmatpush1.bf16.msra.mxu0 %v386
    %584 = vmatprep.subr.bf16.mxu0 0
    %585 = vmatpush1.bf16.msra.mxu0 %v387
    %586 = vmatprep.subr.bf16.mxu0 0
    %587 = vmatpush1.bf16.msra.mxu0 %v388
    %588 = vmatprep.subr.bf16.mxu0 0
    %589 = vmatpush1.bf16.msra.mxu0 %v389
    %590 = vmatprep.subr.bf16.mxu0 0
    %591 = vmatpush1.bf16.msra.mxu0 0
    %592 = vmatprep.subr.bf16.mxu0 0
    %593 = vmatpush1.bf16.msra.mxu0 0
    %594 = vmatprep.subr.bf16.mxu0 0
    %595 = vmatpush1.bf16.msra.mxu0 0
    %596 = vmatprep.subr.bf16.mxu0 0
    %597 = vmatpush1.bf16.msra.mxu0 0
    %598 = vmatprep.subr.bf16.mxu0 0
    %599 = vmatpush1.bf16.msra.mxu0 0
    %600 = vmatprep.subr.bf16.mxu0 0
    %601 = vmatpush1.bf16.msra.mxu0 0
    %602 = vmatprep.subr.bf16.mxu0 0
    %603 = vmatpush1.bf16.msra.mxu0 0
    %604 = vmatprep.subr.bf16.mxu0 0
    %605 = vmatpush1.bf16.msra.mxu0 0
    %606 = vmatprep.mubr.bf16.mxu0 0
    %607 = vmatmul.mubr.bf16.gmra.mrb[0].mxu0 %v571
    %v608 = vpop.f32.mrb[0].mxu0
    %v609 = vadd.f32 %v573, %v608
    %v610 = vpop.f32.mrb[0].mxu0
    %v611 = vpop.f32.mrb[0].mxu0
    %v612 = vpop.f32.mrb[0].mxu0
    %613 = vdwg.mxu0
    %614 = vst [vmem:[%s572] sm:$0xff] %v609
    %v615 = vpack.c.bf16 %v609, %v609
    %s616 = scalar_lea.vmem [#allocation3], 40
    %v617 = vld [vmem:[%s616] sm:$0xff]
    %618 = vmatprep.subr.bf16.mxu0 0
    %619 = vmatpush1.bf16.msra.mxu0 %v382
    %620 = vmatprep.subr.bf16.mxu0 0
    %621 = vmatpush1.bf16.msra.mxu0 %v383
    %622 = vmatprep.subr.bf16.mxu0 0
    %623 = vmatpush1.bf16.msra.mxu0 %v384
    %624 = vmatprep.subr.bf16.mxu0 0
    %625 = vmatpush1.bf16.msra.mxu0 %v385
    %626 = vmatprep.subr.bf16.mxu0 0
    %627 = vmatpush1.bf16.msra.mxu0 %v386
    %628 = vmatprep.subr.bf16.mxu0 0
    %629 = vmatpush1.bf16.msra.mxu0 %v387
    %630 = vmatprep.subr.bf16.mxu0 0
    %631 = vmatpush1.bf16.msra.mxu0 %v388
    %632 = vmatprep.subr.bf16.mxu0 0
    %633 = vmatpush1.bf16.msra.mxu0 %v389
    %634 = vmatprep.subr.bf16.mxu0 0
    %635 = vmatpush1.bf16.msra.mxu0 0
    %636 = vmatprep.subr.bf16.mxu0 0
    %637 = vmatpush1.bf16.msra.mxu0 0
    %638 = vmatprep.subr.bf16.mxu0 0
    %639 = vmatpush1.bf16.msra.mxu0 0
    %640 = vmatprep.subr.bf16.mxu0 0
    %641 = vmatpush1.bf16.msra.mxu0 0
    %642 = vmatprep.subr.bf16.mxu0 0
    %643 = vmatpush1.bf16.msra.mxu0 0
    %644 = vmatprep.subr.bf16.mxu0 0
    %645 = vmatpush1.bf16.msra.mxu0 0
    %646 = vmatprep.subr.bf16.mxu0 0
    %647 = vmatpush1.bf16.msra.mxu0 0
    %648 = vmatprep.subr.bf16.mxu0 0
    %649 = vmatpush1.bf16.msra.mxu0 0
    %650 = vmatprep.mubr.bf16.mxu0 0
    %651 = vmatmul.mubr.bf16.gmra.mrb[0].mxu0 %v615
    %v652 = vpop.f32.mrb[0].mxu0
    %v653 = vadd.f32 %v617, %v652
    %v654 = vpop.f32.mrb[0].mxu0
    %v655 = vpop.f32.mrb[0].mxu0
    %v656 = vpop.f32.mrb[0].mxu0
    %657 = vdwg.mxu0
    %658 = vst [vmem:[%s616] sm:$0xff] %v653
    %v659 = vpack.c.bf16 %v653, %v653
    %s660 = scalar_lea.vmem [#allocation3], 48
    %v661 = vld [vmem:[%s660] sm:$0xff]
    %662 = vmatprep.subr.bf16.mxu0 0
    %663 = vmatpush1.bf16.msra.mxu0 %v382
    %664 = vmatprep.subr.bf16.mxu0 0
    %665 = vmatpush1.bf16.msra.mxu0 %v383
    %666 = vmatprep.subr.bf16.mxu0 0
    %667 = vmatpush1.bf16.msra.mxu0 %v384
    %668 = vmatprep.subr.bf16.mxu0 0
    %669 = vmatpush1.bf16.msra.mxu0 %v385
    %670 = vmatprep.subr.bf16.mxu0 0
    %671 = vmatpush1.bf16.msra.mxu0 %v386
    %672 = vmatprep.subr.bf16.mxu0 0
    %673 = vmatpush1.bf16.msra.mxu0 %v387
    %674 = vmatprep.subr.bf16.mxu0 0
    %675 = vmatpush1.bf16.msra.mxu0 %v388
    %676 = vmatprep.subr.bf16.mxu0 0
    %677 = vmatpush1.bf16.msra.mxu0 %v389
    %678 = vmatprep.subr.bf16.mxu0 0
    %679 = vmatpush1.bf16.msra.mxu0 0
    %680 = vmatprep.subr.bf16.mxu0 0
    %681 = vmatpush1.bf16.msra.mxu0 0
    %682 = vmatprep.subr.bf16.mxu0 0
    %683 = vmatpush1.bf16.msra.mxu0 0
    %684 = vmatprep.subr.bf16.mxu0 0
    %685 = vmatpush1.bf16.msra.mxu0 0
    %686 = vmatprep.subr.bf16.mxu0 0
    %687 = vmatpush1.bf16.msra.mxu0 0
    %688 = vmatprep.subr.bf16.mxu0 0
    %689 = vmatpush1.bf16.msra.mxu0 0
    %690 = vmatprep.subr.bf16.mxu0 0
    %691 = vmatpush1.bf16.msra.mxu0 0
    %692 = vmatprep.subr.bf16.mxu0 0
    %693 = vmatpush1.bf16.msra.mxu0 0
    %694 = vmatprep.mubr.bf16.mxu0 0
    %695 = vmatmul.mubr.bf16.gmra.mrb[0].mxu0 %v659
    %v696 = vpop.f32.mrb[0].mxu0
    %v697 = vadd.f32 %v661, %v696
    %v698 = vpop.f32.mrb[0].mxu0
    %v699 = vpop.f32.mrb[0].mxu0
    %v700 = vpop.f32.mrb[0].mxu0
    %701 = vdwg.mxu0
    %702 = vst [vmem:[%s660] sm:$0xff] %v697
    %v703 = vpack.c.bf16 %v697, %v697
    %s704 = scalar_lea.vmem [#allocation3], 56
    %v705 = vld [vmem:[%s704] sm:$0xff]
    %706 = vmatprep.subr.bf16.mxu0 0
    %707 = vmatpush1.bf16.msra.mxu0 %v382
    %708 = vmatprep.subr.bf16.mxu0 0
    %709 = vmatpush1.bf16.msra.mxu0 %v383
    %710 = vmatprep.subr.bf16.mxu0 0
    %711 = vmatpush1.bf16.msra.mxu0 %v384
    %712 = vmatprep.subr.bf16.mxu0 0
    %713 = vmatpush1.bf16.msra.mxu0 %v385
    %714 = vmatprep.subr.bf16.mxu0 0
    %715 = vmatpush1.bf16.msra.mxu0 %v386
    %716 = vmatprep.subr.bf16.mxu0 0
    %717 = vmatpush1.bf16.msra.mxu0 %v387
    %718 = vmatprep.subr.bf16.mxu0 0
    %719 = vmatpush1.bf16.msra.mxu0 %v388
    %720 = vmatprep.subr.bf16.mxu0 0
    %721 = vmatpush1.bf16.msra.mxu0 %v389
    %722 = vmatprep.subr.bf16.mxu0 0
    %723 = vmatpush1.bf16.msra.mxu0 0
    %724 = vmatprep.subr.bf16.mxu0 0
    %725 = vmatpush1.bf16.msra.mxu0 0
    %726 = vmatprep.subr.bf16.mxu0 0
    %727 = vmatpush1.bf16.msra.mxu0 0
    %728 = vmatprep.subr.bf16.mxu0 0
    %729 = vmatpush1.bf16.msra.mxu0 0
    %730 = vmatprep.subr.bf16.mxu0 0
    %731 = vmatpush1.bf16.msra.mxu0 0
    %732 = vmatprep.subr.bf16.mxu0 0
    %733 = vmatpush1.bf16.msra.mxu0 0
    %734 = vmatprep.subr.bf16.mxu0 0
    %735 = vmatpush1.bf16.msra.mxu0 0
    %736 = vmatprep.subr.bf16.mxu0 0
    %737 = vmatpush1.bf16.msra.mxu0 0
    %738 = vmatprep.mubr.bf16.mxu0 0
    %739 = vmatmul.mubr.bf16.gmra.mrb[0].mxu0 %v703
    %v740 = vpop.f32.mrb[0].mxu0
    %v741 = vadd.f32 %v705, %v740
    %v742 = vpop.f32.mrb[0].mxu0
    %v743 = vpop.f32.mrb[0].mxu0
    %v744 = vpop.f32.mrb[0].mxu0
    %745 = vdwg.mxu0
    %746 = vst [vmem:[%s704] sm:$0xff] %v741
    %747 = vst [vmem:[#allocation2] sm:$0xff] %v741
    %748 = vst [vmem:[#allocation6] sm:$0xff] %v741
    %v749 = vld [vmem:[#allocation3] sm:$0xff]
    %v750 = vld [vmem:[#allocation3 + $0x8] sm:$0xff]
    %v751 = vld [vmem:[#allocation3 + $0x10] sm:$0xff]
    %v752 = vld [vmem:[#allocation3 + $0x18] sm:$0xff]
    %v753 = vld [vmem:[#allocation3 + $0x20] sm:$0xff]
    %v754 = vld [vmem:[#allocation3 + $0x28] sm:$0xff]
    %v755 = vld [vmem:[#allocation3 + $0x30] sm:$0xff]
    %v756 = vld [vmem:[#allocation3 + $0x38] sm:$0xff]
    %v757 = vpack.c.bf16 %v750, %v749
    %v758 = vpack.c.bf16 %v752, %v751
    %v759 = vpack.c.bf16 %v754, %v753
    %v760 = vpack.c.bf16 %v756, %v755
    %v761 = vld [vmem:[%s7] sm:$0xf]
    %v762 = vld [vmem:[%s7 + $0x4] sm:$0xf]
    %v763 = vld [vmem:[%s7 + $0x8] sm:$0xf]
    %v764 = vld [vmem:[%s7 + $0xc] sm:$0xf]
    %v765 = vld [vmem:[%s7 + $0x10] sm:$0xf]
    %v766 = vld [vmem:[%s7 + $0x14] sm:$0xf]
    %v767 = vld [vmem:[%s7 + $0x18] sm:$0xf]
    %v768 = vld [vmem:[%s7 + $0x1c] sm:$0xf]
    %v769 = vld [vmem:[%s7 + $0x20] sm:$0xf]
    %v770 = vld [vmem:[%s7 + $0x24] sm:$0xf]
    %v771 = vld [vmem:[%s7 + $0x28] sm:$0xf]
    %v772 = vld [vmem:[%s7 + $0x2c] sm:$0xf]
    %v773 = vld [vmem:[%s7 + $0x30] sm:$0xf]
    %v774 = vld [vmem:[%s7 + $0x34] sm:$0xf]
    %v775 = vld [vmem:[%s7 + $0x38] sm:$0xf]
    %v776 = vld [vmem:[%s7 + $0x3c] sm:$0xf]
    %v777 = vld [vmem:[%s8] sm:$0x1]
    %v779 = vlaneseq
    %v780 = vshrl.u32 %v779, 7
    %v781 = vsub.s32 0, %v780
    %v782 = vrot.slane %v777, %v781
    %v800 = vunpack.c.l.b16 %v761
    %v801 = vunpack.c.l.b16 %v762
    %v802 = vunpack.c.l.b16 %v763
    %v803 = vunpack.c.l.b16 %v764
    %v804 = vunpack.c.l.b16 %v765
    %v805 = vunpack.c.l.b16 %v766
    %v806 = vunpack.c.l.b16 %v767
    %v807 = vunpack.c.l.b16 %v768
    %v808 = vunpack.c.l.b16 %v769
    %v809 = vunpack.c.l.b16 %v770
    %v810 = vunpack.c.l.b16 %v771
    %v811 = vunpack.c.l.b16 %v772
    %v812 = vunpack.c.l.b16 %v773
    %v813 = vunpack.c.l.b16 %v774
    %v814 = vunpack.c.l.b16 %v775
    %v815 = vunpack.c.l.b16 %v776
    %v816 = vpack.c.b16 %v801, %v800
    %v817 = vpack.c.b16 %v803, %v802
    %v818 = vpack.c.b16 %v805, %v804
    %v819 = vpack.c.b16 %v807, %v806
    %v820 = vpack.c.b16 %v809, %v808
    %v821 = vpack.c.b16 %v811, %v810
    %v822 = vpack.c.b16 %v813, %v812
    %v823 = vpack.c.b16 %v815, %v814
    %832 = vmatprep.subr.bf16.mxu0 0
    %833 = vmatpush1.bf16.msra.mxu0 %v816
    %834 = vmatprep.subr.bf16.mxu0 0
    %835 = vmatpush1.bf16.msra.mxu0 %v817
    %836 = vmatprep.subr.bf16.mxu0 0
    %837 = vmatpush1.bf16.msra.mxu0 %v818
    %838 = vmatprep.subr.bf16.mxu0 0
    %839 = vmatpush1.bf16.msra.mxu0 %v819
    %840 = vmatprep.subr.bf16.mxu0 0
    %841 = vmatpush1.bf16.msra.mxu0 %v820
    %842 = vmatprep.subr.bf16.mxu0 0
    %843 = vmatpush1.bf16.msra.mxu0 %v821
    %844 = vmatprep.subr.bf16.mxu0 0
    %845 = vmatpush1.bf16.msra.mxu0 %v822
    %846 = vmatprep.subr.bf16.mxu0 0
    %847 = vmatpush1.bf16.msra.mxu0 %v823
    %848 = vmatprep.subr.bf16.mxu0 0
    %849 = vmatpush1.bf16.msra.mxu0 0
    %850 = vmatprep.subr.bf16.mxu0 0
    %851 = vmatpush1.bf16.msra.mxu0 0
    %852 = vmatprep.subr.bf16.mxu0 0
    %853 = vmatpush1.bf16.msra.mxu0 0
    %854 = vmatprep.subr.bf16.mxu0 0
    %855 = vmatpush1.bf16.msra.mxu0 0
    %856 = vmatprep.subr.bf16.mxu0 0
    %857 = vmatpush1.bf16.msra.mxu0 0
    %858 = vmatprep.subr.bf16.mxu0 0
    %859 = vmatpush1.bf16.msra.mxu0 0
    %860 = vmatprep.subr.bf16.mxu0 0
    %861 = vmatpush1.bf16.msra.mxu0 0
    %862 = vmatprep.subr.bf16.mxu0 0
    %863 = vmatpush1.bf16.msra.mxu0 0
    %864 = vmatprep.mubr.bf16.mxu0 0
    %865 = vmatmul.mubr.bf16.gmra.mrb[0].mxu0 %v757
    %v866 = vpop.f32.mrb[0].mxu0
    %v867 = vadd.f32 %v782, %v866
    %v868 = vpop.f32.mrb[0].mxu0
    %v869 = vpop.f32.mrb[0].mxu0
    %v870 = vadd.f32 %v782, %v869
    %v871 = vpop.f32.mrb[0].mxu0
    %872 = vmatprep.mubr.bf16.mxu0 0
    %873 = vmatmul.mubr.bf16.gmra.mrb[0].mxu0 %v758
    %v874 = vpop.f32.mrb[0].mxu0
    %v875 = vadd.f32 %v782, %v874
    %v876 = vpop.f32.mrb[0].mxu0
    %v877 = vpop.f32.mrb[0].mxu0
    %v878 = vadd.f32 %v782, %v877
    %v879 = vpop.f32.mrb[0].mxu0
    %880 = vmatprep.mubr.bf16.mxu0 0
    %881 = vmatmul.mubr.bf16.gmra.mrb[0].mxu0 %v759
    %v882 = vpop.f32.mrb[0].mxu0
    %v883 = vadd.f32 %v782, %v882
    %v884 = vpop.f32.mrb[0].mxu0
    %v885 = vpop.f32.mrb[0].mxu0
    %v886 = vadd.f32 %v782, %v885
    %v887 = vpop.f32.mrb[0].mxu0
    %888 = vmatprep.mubr.bf16.mxu0 0
    %889 = vmatmul.mubr.bf16.gmra.mrb[0].mxu0 %v760
    %v890 = vpop.f32.mrb[0].mxu0
    %v891 = vadd.f32 %v782, %v890
    %v892 = vpop.f32.mrb[0].mxu0
    %v893 = vpop.f32.mrb[0].mxu0
    %v894 = vadd.f32 %v782, %v893
    %v895 = vpop.f32.mrb[0].mxu0
    %896 = vdwg.mxu0
    %v897 = vlaneseq
    %v898 = vand.u32 %v897, 127
    %vm899 = vcmp.lt.s32.totalorder %v898, 16
    %v900 = vsel %vm899, 1, 0
    %vm901 = vcmp.eq.s32.totalorder %v900, 1
    %v902 = vsel %vm901, %v867, -1e+30
    %v903 = vsel %vm901, %v870, -1e+30
    %v904 = vsel %vm901, %v875, -1e+30
    %v905 = vsel %vm901, %v878, -1e+30
    %v906 = vsel %vm901, %v883, -1e+30
    %v907 = vsel %vm901, %v886, -1e+30
    %v908 = vsel %vm901, %v891, -1e+30
    %v909 = vsel %vm901, %v894, -1e+30
    %910 = vmax.xlane.f32.xlu0 %v902
    %v911 = vpop.xlane.xlu0 %910
    %912 = vmax.xlane.f32.xlu0 %v903
    %v913 = vpop.xlane.xlu0 %912
    %914 = vmax.xlane.f32.xlu0 %v904
    %v915 = vpop.xlane.xlu0 %914
    %916 = vmax.xlane.f32.xlu0 %v905
    %v917 = vpop.xlane.xlu0 %916
    %918 = vmax.xlane.f32.xlu0 %v906
    %v919 = vpop.xlane.xlu0 %918
    %920 = vmax.xlane.f32.xlu0 %v907
    %v921 = vpop.xlane.xlu0 %920
    %922 = vmax.xlane.f32.xlu0 %v908
    %v923 = vpop.xlane.xlu0 %922
    %924 = vmax.xlane.f32.xlu0 %v909
    %v925 = vpop.xlane.xlu0 %924
    %v926 = vsub.f32 %v902, %v911
    %v927 = vsub.f32 %v903, %v913
    %v928 = vsub.f32 %v904, %v915
    %v929 = vsub.f32 %v905, %v917
    %v930 = vsub.f32 %v906, %v919
    %v931 = vsub.f32 %v907, %v921
    %v932 = vsub.f32 %v908, %v923
    %v933 = vsub.f32 %v909, %v925
    %v934 = vmul.f32 %v926, 1.442695
    %v935 = vpow.pop %v934
    %v936 = vmul.f32 %v927, 1.442695
    %v937 = vpow.pop %v936
    %v938 = vmul.f32 %v928, 1.442695
    %v939 = vpow.pop %v938
    %v940 = vmul.f32 %v929, 1.442695
    %v941 = vpow.pop %v940
    %v942 = vmul.f32 %v930, 1.442695
    %v943 = vpow.pop %v942
    %v944 = vmul.f32 %v931, 1.442695
    %v945 = vpow.pop %v944
    %v946 = vmul.f32 %v932, 1.442695
    %v947 = vpow.pop %v946
    %v948 = vmul.f32 %v933, 1.442695
    %v949 = vpow.pop %v948
    %950 = vadd.xlane.f32.xlu0 %v935
    %v951 = vpop.xlane.xlu0 %950
    %952 = vadd.xlane.f32.xlu0 %v937
    %v953 = vpop.xlane.xlu0 %952
    %954 = vadd.xlane.f32.xlu0 %v939
    %v955 = vpop.xlane.xlu0 %954
    %956 = vadd.xlane.f32.xlu0 %v941
    %v957 = vpop.xlane.xlu0 %956
    %958 = vadd.xlane.f32.xlu0 %v943
    %v959 = vpop.xlane.xlu0 %958
    %960 = vadd.xlane.f32.xlu0 %v945
    %v961 = vpop.xlane.xlu0 %960
    %962 = vadd.xlane.f32.xlu0 %v947
    %v963 = vpop.xlane.xlu0 %962
    %964 = vadd.xlane.f32.xlu0 %v949
    %v965 = vpop.xlane.xlu0 %964
    %v966 = vlog2.pop %v951
    %v967 = vmul.f32 %v966, 0.6931472
    %v968 = vlog2.pop %v953
    %v969 = vmul.f32 %v968, 0.6931472
    %v970 = vlog2.pop %v955
    %v971 = vmul.f32 %v970, 0.6931472
    %v972 = vlog2.pop %v957
    %v973 = vmul.f32 %v972, 0.6931472
    %v974 = vlog2.pop %v959
    %v975 = vmul.f32 %v974, 0.6931472
    %v976 = vlog2.pop %v961
    %v977 = vmul.f32 %v976, 0.6931472
    %v978 = vlog2.pop %v963
    %v979 = vmul.f32 %v978, 0.6931472
    %v980 = vlog2.pop %v965
    %v981 = vmul.f32 %v980, 0.6931472
    %v982 = vsub.f32 %v926, %v967
    %v983 = vsub.f32 %v927, %v969
    %v984 = vsub.f32 %v928, %v971
    %v985 = vsub.f32 %v929, %v973
    %v986 = vsub.f32 %v930, %v975
    %v987 = vsub.f32 %v931, %v977
    %v988 = vsub.f32 %v932, %v979
    %v989 = vsub.f32 %v933, %v981
    %vm990 = vcmask 130048
    %991 = vst.msk [vmem:[#allocation4] sm:$0xff] %vm990, %v982
    %992 = vst.msk [vmem:[#allocation4 + $0x8] sm:$0xff] %vm990, %v983
    %993 = vst.msk [vmem:[#allocation4 + $0x10] sm:$0xff] %vm990, %v984
    %994 = vst.msk [vmem:[#allocation4 + $0x18] sm:$0xff] %vm990, %v985
    %995 = vst.msk [vmem:[#allocation4 + $0x20] sm:$0xff] %vm990, %v986
    %996 = vst.msk [vmem:[#allocation4 + $0x28] sm:$0xff] %vm990, %v987
    %997 = vst.msk [vmem:[#allocation4 + $0x30] sm:$0xff] %vm990, %v988
    %998 = vst.msk [vmem:[#allocation4 + $0x38] sm:$0xff] %vm990, %v989
    %999 = vst.msk [vmem:[#allocation8] sm:$0xff] %vm990, %v867
    %1000 = vst.msk [vmem:[#allocation8 + $0x8] sm:$0xff] %vm990, %v870
    %1001 = vst.msk [vmem:[#allocation8 + $0x10] sm:$0xff] %vm990, %v875
    %1002 = vst.msk [vmem:[#allocation8 + $0x18] sm:$0xff] %vm990, %v878
    %1003 = vst.msk [vmem:[#allocation8 + $0x20] sm:$0xff] %vm990, %v883
    %1004 = vst.msk [vmem:[#allocation8 + $0x28] sm:$0xff] %vm990, %v886
    %1005 = vst.msk [vmem:[#allocation8 + $0x30] sm:$0xff] %vm990, %v891
    %1006 = vst.msk [vmem:[#allocation8 + $0x38] sm:$0xff] %vm990, %v894
    // Predicated region
    $region42: #{_label_rnn_run.1} parent=1 // pred_check
      _
    $region43: #{_label_rnn_run.1} parent=1 // pred_check_branch
      %1008 = sbr.rel (0) target = $region45
    $region44: #{_label_rnn_run.1} parent=1 // pred_region
      %s1010 = ssub.s32 1024, 1024
      %1011 = vsyncadd [#allocation5], %s1010
      %s1012 = sshll.u32 [#allocation4], 4
      %s1013 = int_to_ptr.vmem [resolvable:$true] %s1012
      %1018 = dma.vmem_to_hbm [thread:$0]  %s1013, 1024, %s9, [#allocation5], 128, 128, 8
    $region45: #{_label_rnn_run.1} parent=1 // pred_fallthru
      _
    // Predicated region
    $region46: #{_label_rnn_run.1} parent=1 // pred_check
      _
    $region47: #{_label_rnn_run.1} parent=1 // pred_check_branch
      %1020 = sbr.rel (0) target = $region49
    $region48: #{_label_rnn_run.1} parent=1 // pred_region
      %s1022 = ssub.s32 128, 128
      %1023 = vsyncadd [#allocation7], %s1022
      %s1025 = sshll.u32 [#allocation6], 4
      %s1026 = int_to_ptr.vmem [resolvable:$true] %s1025
      %1028 = dma.vmem_to_hbm [thread:$0]  %s1026, 128, %s10, [#allocation7]
    $region49: #{_label_rnn_run.1} parent=1 // pred_fallthru
      _
    // Predicated region
    $region50: #{_label_rnn_run.1} parent=1 // pred_check
      _
    $region51: #{_label_rnn_run.1} parent=1 // pred_check_branch
      %1030 = sbr.rel (0) target = $region53
    $region52: #{_label_rnn_run.1} parent=1 // pred_region
      %s1032 = ssub.s32 1024, 1024
      %1033 = vsyncadd [#allocation7], %s1032
      %s1034 = sshll.u32 [#allocation8], 4
      %s1035 = int_to_ptr.vmem [resolvable:$true] %s1034
      %1040 = dma.vmem_to_hbm [thread:$0]  %s1035, 1024, %s11, [#allocation7], 128, 128, 8
    $region53: #{_label_rnn_run.1} parent=1 // pred_fallthru
      _
    // Predicated region
    $region54: #{_label_rnn_run.1} parent=1 // pred_check
      _
    $region55: #{_label_rnn_run.1} parent=1 // pred_check_branch
      %1042 = sbr.rel (0) target = $region57
    $region56: #{_label_rnn_run.1} parent=1 // pred_region
      %1043 = dma.done [#allocation5], 1024
    $region57: #{_label_rnn_run.1} parent=1 // pred_fallthru
      _
    // Predicated region
    $region58: #{_label_rnn_run.1} parent=1 // pred_check
      _
    $region59: #{_label_rnn_run.1} parent=1 // pred_check_branch
      %1045 = sbr.rel (0) target = $region61
    $region60: #{_label_rnn_run.1} parent=1 // pred_region
      %1046 = dma.done [#allocation7], 128
    $region61: #{_label_rnn_run.1} parent=1 // pred_fallthru
      _
    // Predicated region
    $region62: #{_label_rnn_run.1} parent=1 // pred_check
      _
    $region63: #{_label_rnn_run.1} parent=1 // pred_check_branch
      %1048 = sbr.rel (0) target = $region65
    $region64: #{_label_rnn_run.1} parent=1 // pred_region
      %1049 = dma.done [#allocation7], 1024
    $region65: #{_label_rnn_run.1} parent=1 // pred_fallthru
      _
    %1050 = vsyncpa [#allocation5], 1
    %1051 = vsyncpa [#allocation7], 1

</llo_original>
